<compile_context>
chip_gen: v6e
topology: v6e:2x2x1
jax: 0.10.0
libtpu: 0.0.40
codegen_flags: <defaults>
</compile_context>

<pallas_src>
import math

import jax
import jax.numpy as jnp
import numpy as np
from jax.experimental import pallas as pl
from jax.experimental.pallas import tpu as pltpu

EMBED_DIM = 32
NUM_HEADS = 4
HEAD_DIM = EMBED_DIM // NUM_HEADS
FF_DIM = EMBED_DIM * 4
LN_EPS = 1e-5

# Row layout of the packed parameter slab (lane width = 4*E = FF_DIM = 128):
#   rows [0, 2E)        : [[Wq^T*s, Wk^T, 0, Wo^T], [0, 0, Wv^T, 0]]   fused projection
#   rows [2E, 3E)       : W1^T  (E, 4E)                                FFN up-proj
#   row  3E + 0         : [bq*s | bk | bv | bo]
#   row  3E + 1         : [ln2_w | ln2_b | ln3_w | ln3_b]
#   row  3E + 2         : [ff2_b | 0 | 0 | 0]
#   row  3E + 3         : ff1_b (4E)
#   rows [3E+8, 3E+8+R) : block-diagonal additive attention bias, lanes [0, R)
_ROW_W1 = 2 * EMBED_DIM
_ROW_VEC = 3 * EMBED_DIM
_ROW_BIAS = _ROW_VEC + 8


def _layer_norm(x, gamma, beta, eps=LN_EPS):
    mu = jnp.mean(x, axis=-1, keepdims=True)
    xc = x - mu
    var = jnp.mean(xc * xc, axis=-1, keepdims=True)
    return xc * jax.lax.rsqrt(var + eps) * gamma + beta


def _decoder_kernel(acts_ref, w_ref, w2_ref, o_ref):
    """Fused decoder block: cross-MHA (q,k from memory; v from embedding) + LN + FFN + LN.

    acts_ref: (R, 2E) = [memory | embedding], row r = l*N + n (attention-batch-major).
    w_ref:    (3E + 8 + R, 4E) packed parameter slab (layout above).
    w2_ref:   (4E, E) FFN down-projection.
    """
    E = EMBED_DIM
    H = NUM_HEADS
    Dh = HEAD_DIM
    R = acts_ref.shape[0]

    acts = acts_ref[...]                       # (R, 2E): [memory | embedding]
    x = acts[:, E:2 * E]                       # embedding = value / residual stream

    # Fused Q/K/V (+ ignored Wo spill in the last E lanes) projection: one MXU push.
    qkv = jnp.dot(acts, w_ref[0:2 * E, :], preferred_element_type=jnp.float32)  # (R, 4E)
    qkv = qkv + w_ref[_ROW_VEC:_ROW_VEC + 1, :]   # adds [bq*s | bk | bv | bo]; tail unused
    q = qkv[:, 0:E]
    k = qkv[:, E:2 * E]
    v = qkv[:, 2 * E:3 * E]

    # Precomputed block-diagonal additive mask (0 inside own attention batch, -1e30 out).
    attn_bias = w_ref[_ROW_BIAS:_ROW_BIAS + R, 0:R]   # (R, R)

    ctx_parts = []
    for h in range(H):                          # H = 4, small compile-time constant
        sl = slice(h * Dh, (h + 1) * Dh)
        qh = q[:, sl]                           # (R, Dh)
        kh = k[:, sl]
        vh = v[:, sl]
        s = jax.lax.dot_general(qh, kh, (((1,), (1,)), ((), ())),
                                preferred_element_type=jnp.float32)      # (R, R)
        s = s + attn_bias
        p = jnp.exp(s - jnp.max(s, axis=-1, keepdims=True))
        # Deferred normalization: scale the (R, Dh) context, reciprocal on the EUP.
        inv = pl.reciprocal(jnp.sum(p, axis=-1, keepdims=True))          # exact mode
        ctx_parts.append(jnp.dot(p, vh, preferred_element_type=jnp.float32) * inv)
    ctx = jnp.concatenate(ctx_parts, axis=-1)   # (R, E) concat-heads, kept in vregs

    w_o = w_ref[0:E, 3 * E:4 * E]
    bo = w_ref[_ROW_VEC:_ROW_VEC + 1, 3 * E:4 * E]
    attn = jnp.dot(ctx, w_o, preferred_element_type=jnp.float32) + bo

    g2 = w_ref[_ROW_VEC + 1:_ROW_VEC + 2, 0:E]
    be2 = w_ref[_ROW_VEC + 1:_ROW_VEC + 2, E:2 * E]
    g3 = w_ref[_ROW_VEC + 1:_ROW_VEC + 2, 2 * E:3 * E]
    be3 = w_ref[_ROW_VEC + 1:_ROW_VEC + 2, 3 * E:4 * E]
    b2 = w_ref[_ROW_VEC + 2:_ROW_VEC + 3, 0:E]
    b1 = w_ref[_ROW_VEC + 3:_ROW_VEC + 4, :]

    # residual + LayerNorm2
    out2 = _layer_norm(attn + x, g2, be2)

    # feed forward: Linear(E->4E) -> ReLU -> Linear(4E->E)
    h1 = jnp.dot(out2, w_ref[_ROW_W1:_ROW_W1 + E, :],
                 preferred_element_type=jnp.float32) + b1
    h1 = jnp.maximum(h1, 0.0)
    out3 = jnp.dot(h1, w2_ref[...], preferred_element_type=jnp.float32) + b2

    # residual + LayerNorm3
    o_ref[...] = _layer_norm(out3 + out2, g3, be3).astype(o_ref.dtype)


def prepare_params(params, L, N):
    """One-time host-side repack of PyTorch-layout parameters into 2 kernel arrays."""
    E, Dh, F = EMBED_DIM, HEAD_DIM, FF_DIM
    R = L * N
    # The attention mask lives in the first R lanes of the 4E-wide slab.
    # TODO(synk): for R > 4E (larger seq*batch) switch to a blocked / per-batch path.
    assert R <= 4 * E, "packed-slab mask only supports L*N <= 4*EMBED_DIM"
    scale = 1.0 / math.sqrt(Dh)
    f32 = np.float32

    w_in = np.asarray(params["in_proj_weight"], f32)          # (3E, E)
    b_in = np.asarray(params["in_proj_bias"], f32)            # (3E,)

    # Block-diagonal fused projection weight, Wo packed into the spare last-E lanes.
    qkvo = np.zeros((2 * E, 4 * E), f32)
    qkvo[0:E, 0:E] = w_in[0:E, :].T * scale                   # Wq^T * 1/sqrt(Dh)
    qkvo[0:E, E:2 * E] = w_in[E:2 * E, :].T                   # Wk^T
    qkvo[E:2 * E, 2 * E:3 * E] = w_in[2 * E:3 * E, :].T       # Wv^T
    qkvo[0:E, 3 * E:4 * E] = np.asarray(params["out_proj_weight"], f32).T   # Wo^T

    w1_t = np.asarray(params["ff1_weight"], f32).T            # (E, 4E)
    w2_t = np.asarray(params["ff2_weight"], f32).T            # (4E, E)

    # Packed bias / gamma vectors (8 rows allocated for 8-sublane alignment of the mask).
    vecs = np.zeros((8, 4 * E), f32)
    vecs[0, 0:E] = b_in[0:E] * scale
    vecs[0, E:2 * E] = b_in[E:2 * E]
    vecs[0, 2 * E:3 * E] = b_in[2 * E:3 * E]
    vecs[0, 3 * E:4 * E] = np.asarray(params["out_proj_bias"], f32)
    vecs[1, 0:E] = np.asarray(params["ln2_weight"], f32)
    vecs[1, E:2 * E] = np.asarray(params["ln2_bias"], f32)
    vecs[1, 2 * E:3 * E] = np.asarray(params["ln3_weight"], f32)
    vecs[1, 3 * E:4 * E] = np.asarray(params["ln3_bias"], f32)
    vecs[2, 0:E] = np.asarray(params["ff2_bias"], f32)
    vecs[3, :] = np.asarray(params["ff1_bias"], f32)

    # Block-diagonal additive attention bias: row r = l*N + n may only attend within
    # its own attention batch l (T = N consecutive rows).  Built once, host-side.
    rr = np.arange(R)
    same = (rr[:, None] // N) == (rr[None, :] // N)
    bias = np.zeros((R, 4 * E), f32)
    bias[:, 0:R] = np.where(same, 0.0, -1e30).astype(f32)

    w_big = np.concatenate([qkvo, w1_t, vecs, bias], axis=0)  # (3E + 8 + R, 4E)
    return {
        "w_big": jnp.asarray(w_big),      # (3E+8+R, 128) single lane-dense slab
        "w2": jnp.asarray(w2_t),          # (4E, E)
    }


def decoder_forward(embedding, memory, prep):
    """embedding, memory: (L, N, E) in PyTorch (seq, batch, embed) convention.

    Returns (N, L, E), matching the PyTorch module's output shape.
    """
    L, N, E = embedding.shape
    # PyTorch's packed-in_proj MHA requires key.shape == value.shape here.
    assert memory.shape == embedding.shape
    assert E == EMBED_DIM
    R = L * N
    # Static shape consistency with the prepared mask (no traced values involved).
    assert prep["w_big"].shape[0] - _ROW_BIAS == R, \
        "prepare_params() was built for a different (L, N)"

    # Single concatenated activation slab: [memory | embedding] -> one input DMA.
    acts = jnp.concatenate(
        [memory.reshape(R, E), embedding.reshape(R, E)], axis=1)   # (R, 2E)

    out2d = pl.pallas_call(
        _decoder_kernel,
        out_shape=jax.ShapeDtypeStruct((R, E), embedding.dtype),
        in_specs=[pl.BlockSpec(memory_space=pltpu.MemorySpace.VMEM)] * 3,
        out_specs=pl.BlockSpec(memory_space=pltpu.MemorySpace.VMEM),
    )(acts, prep["w_big"], prep["w2"])

    # PyTorch module returns shape (N, L, E).  The final row permutation stays in
    # the wrapper: at these shapes it is a single ~2 KiB copy (negligible).
    return jnp.transpose(out2d.reshape(L, N, E), (1, 0, 2))


def decoder_reference(embedding, memory, params):
    """Plain-JAX reference reproducing the PyTorch forward's effective path."""
    E = embedding.shape[-1]
    H, Dh = NUM_HEADS, HEAD_DIM
    out1 = jnp.transpose(embedding, (1, 0, 2))   # (N, L, E) -- value stream
    mem = jnp.transpose(memory, (1, 0, 2))       # (N, L, E) -- query/key stream
    w_in, b_in = params["in_proj_weight"], params["in_proj_bias"]

    def proj(x, w, b):
        return jnp.einsum("sbe,fe->sbf", x, w) + b

    q = proj(mem, w_in[0:E], b_in[0:E])
    k = proj(mem, w_in[E:2 * E], b_in[E:2 * E])
    v = proj(out1, w_in[2 * E:3 * E], b_in[2 * E:3 * E])
    Tq, Bq, _ = q.shape
    qh = q.reshape(Tq, Bq, H, Dh)
    kh = k.reshape(Tq, Bq, H, Dh)
    vh = v.reshape(Tq, Bq, H, Dh)
    scores = jnp.einsum("tbhd,sbhd->bhts", qh, kh) / math.sqrt(Dh)
    probs = jax.nn.softmax(scores, axis=-1)
    ctx = jnp.einsum("bhts,sbhd->tbhd", probs, vh).reshape(Tq, Bq, E)
    attn = jnp.einsum("tbe,fe->tbf", ctx, params["out_proj_weight"]) + params["out_proj_bias"]

    def ln(x, g, b):
        mu = x.mean(-1, keepdims=True)
        xc = x - mu
        var = (xc * xc).mean(-1, keepdims=True)
        return xc / jnp.sqrt(var + LN_EPS) * g + b

    out2 = ln(attn + out1, params["ln2_weight"], params["ln2_bias"])
    h1 = jax.nn.relu(jnp.einsum("tbe,fe->tbf", out2, params["ff1_weight"]) + params["ff1_bias"])
    out3 = jnp.einsum("tbf,ef->tbe", h1, params["ff2_weight"]) + params["ff2_bias"]
    return ln(out3 + out2, params["ln3_weight"], params["ln3_bias"])


def init_params(key, E=EMBED_DIM):
    # Deterministic synthetic parameters (shapes match the nn.Module; masked-MHA and
    # normalization1 params are omitted because that branch is dead code in forward()).
    keys = jax.random.split(key, 8)
    s = 0.1
    return {
        "in_proj_weight": jax.random.normal(keys[0], (3 * E, E), jnp.float32) * s,
        "in_proj_bias":   jax.random.normal(keys[1], (3 * E,), jnp.float32) * s,
        "out_proj_weight": jax.random.normal(keys[2], (E, E), jnp.float32) * s,
        "out_proj_bias":   jax.random.normal(keys[3], (E,), jnp.float32) * s,
        "ln2_weight": jnp.ones((E,), jnp.float32),
        "ln2_bias":   jnp.zeros((E,), jnp.float32),
        "ln3_weight": jnp.ones((E,), jnp.float32),
        "ln3_bias":   jnp.zeros((E,), jnp.float32),
        "ff1_weight": jax.random.normal(keys[4], (4 * E, E), jnp.float32) * s,
        "ff1_bias":   jax.random.normal(keys[5], (4 * E,), jnp.float32) * s,
        "ff2_weight": jax.random.normal(keys[6], (E, 4 * E), jnp.float32) * s,
        "ff2_bias":   jax.random.normal(keys[7], (E,), jnp.float32) * s,
    }


if __name__ == "__main__":
    key = jax.random.PRNGKey(0)
    k_emb, k_mem, k_par = jax.random.split(key, 3)

    L, N, E = 8, 2, EMBED_DIM      # (seq, batch, embed) — PyTorch MHA convention
    embedding = jax.random.normal(k_emb, (L, N, E), jnp.float32)
    memory = jax.random.normal(k_mem, (L, N, E), jnp.float32)
    params = init_params(k_par)

    # One-time parameter repack (hoisted out of the per-call forward path).
    prep = prepare_params(params, L, N)

    fwd = jax.jit(decoder_forward)
    out = jax.block_until_ready(fwd(embedding, memory, prep))

    ref = decoder_reference(embedding, memory, params)
    assert out.shape == (N, L, E), out.shape
    if not np.allclose(np.asarray(out), np.asarray(ref), atol=1e-4, rtol=1e-4):
        raise AssertionError("Pallas kernel output does not match reference")
    print("KERNEL_OK")
</pallas_src>

<mosaic_0001>
module attributes {stable_mosaic.version = 11 : i64} {
  func.func @_decoder_kernel(%arg0: memref<16x64xf32, #tpu.memory_space<vmem>>, %arg1: memref<120x128xf32, #tpu.memory_space<vmem>>, %arg2: memref<128x32xf32, #tpu.memory_space<vmem>>, %arg3: memref<16x32xf32, #tpu.memory_space<vmem>>) attributes {dimension_semantics = [], scalar_prefetch = 0 : i64, scratch_operands = 0 : i64, tpu.core_type = #tpu.core_type<tc>} {
    %c0 = arith.constant 0 : index
    %c0_0 = arith.constant 0 : index
    %0 = vector.load %arg0[%c0, %c0_0] : memref<16x64xf32, #tpu.memory_space<vmem>>, vector<16x64xf32>
    %1 = vector.extract_strided_slice %0 {offsets = [0, 32], sizes = [16, 32], strides = [1, 1]} : vector<16x64xf32> to vector<16x32xf32>
    %c0_1 = arith.constant 0 : index
    %c0_2 = arith.constant 0 : index
    %2 = vector.load %arg1[%c0_1, %c0_2] : memref<120x128xf32, #tpu.memory_space<vmem>>, vector<64x128xf32>
    %cst = arith.constant dense<0.000000e+00> : vector<16x128xf32>
    %3 = tpu.matmul %0, %2, %cst {dimension_numbers = #tpu.dot_dimension_numbers<[1], [0], [0], [1], [0, 0, 1, 1], [], []>} : vector<16x64xf32>, vector<64x128xf32>, vector<16x128xf32> -> vector<16x128xf32>
    %c96 = arith.constant 96 : index
    %c0_3 = arith.constant 0 : index
    %4 = vector.load %arg1[%c96, %c0_3] : memref<120x128xf32, #tpu.memory_space<vmem>>, vector<1x128xf32>
    %5 = vector.broadcast %4 : vector<1x128xf32> to vector<16x128xf32>
    %6 = arith.addf %3, %5 : vector<16x128xf32>
    %7 = vector.extract_strided_slice %6 {offsets = [0, 0], sizes = [16, 32], strides = [1, 1]} : vector<16x128xf32> to vector<16x32xf32>
    %8 = vector.extract_strided_slice %6 {offsets = [0, 32], sizes = [16, 32], strides = [1, 1]} : vector<16x128xf32> to vector<16x32xf32>
    %9 = vector.extract_strided_slice %6 {offsets = [0, 64], sizes = [16, 32], strides = [1, 1]} : vector<16x128xf32> to vector<16x32xf32>
    %c104 = arith.constant 104 : index
    %c0_4 = arith.constant 0 : index
    %10 = vector.load %arg1[%c104, %c0_4] : memref<120x128xf32, #tpu.memory_space<vmem>>, vector<16x16xf32>
    %11 = vector.extract_strided_slice %7 {offsets = [0, 0], sizes = [16, 8], strides = [1, 1]} : vector<16x32xf32> to vector<16x8xf32>
    %12 = vector.extract_strided_slice %8 {offsets = [0, 0], sizes = [16, 8], strides = [1, 1]} : vector<16x32xf32> to vector<16x8xf32>
    %13 = vector.extract_strided_slice %9 {offsets = [0, 0], sizes = [16, 8], strides = [1, 1]} : vector<16x32xf32> to vector<16x8xf32>
    %cst_5 = arith.constant dense<0.000000e+00> : vector<16x16xf32>
    %14 = tpu.matmul %11, %12, %cst_5 {dimension_numbers = #tpu.dot_dimension_numbers<[1], [1], [0], [0], [0, 0, 1, 0], [], []>} : vector<16x8xf32>, vector<16x8xf32>, vector<16x16xf32> -> vector<16x16xf32>
    %15 = arith.addf %14, %10 : vector<16x16xf32>
    %cst_6 = arith.constant dense<0xFF800000> : vector<16xf32>
    %16 = vector.multi_reduction <maximumf>, %15, %cst_6 [1] : vector<16x16xf32> to vector<16xf32>
    %17 = vector.shape_cast %16 : vector<16xf32> to vector<16x1xf32>
    %18 = vector.broadcast %17 : vector<16x1xf32> to vector<16x16xf32>
    %19 = arith.subf %15, %18 : vector<16x16xf32>
    %20 = math.exp %19 : vector<16x16xf32>
    %cst_7 = arith.constant dense<0.000000e+00> : vector<16xf32>
    %21 = vector.multi_reduction <add>, %20, %cst_7 [1] : vector<16x16xf32> to vector<16xf32>
    %22 = vector.shape_cast %21 : vector<16xf32> to vector<16x1xf32>
    %23 = tpu.reciprocal %22 : vector<16x1xf32> -> vector<16x1xf32>
    %cst_8 = arith.constant dense<0.000000e+00> : vector<16x8xf32>
    %24 = tpu.matmul %20, %13, %cst_8 {dimension_numbers = #tpu.dot_dimension_numbers<[1], [0], [0], [1], [0, 0, 1, 1], [], []>} : vector<16x16xf32>, vector<16x8xf32>, vector<16x8xf32> -> vector<16x8xf32>
    %25 = vector.broadcast %23 : vector<16x1xf32> to vector<16x8xf32>
    %26 = arith.mulf %24, %25 : vector<16x8xf32>
    %27 = vector.extract_strided_slice %7 {offsets = [0, 8], sizes = [16, 8], strides = [1, 1]} : vector<16x32xf32> to vector<16x8xf32>
    %28 = vector.extract_strided_slice %8 {offsets = [0, 8], sizes = [16, 8], strides = [1, 1]} : vector<16x32xf32> to vector<16x8xf32>
    %29 = vector.extract_strided_slice %9 {offsets = [0, 8], sizes = [16, 8], strides = [1, 1]} : vector<16x32xf32> to vector<16x8xf32>
    %cst_9 = arith.constant dense<0.000000e+00> : vector<16x16xf32>
    %30 = tpu.matmul %27, %28, %cst_9 {dimension_numbers = #tpu.dot_dimension_numbers<[1], [1], [0], [0], [0, 0, 1, 0], [], []>} : vector<16x8xf32>, vector<16x8xf32>, vector<16x16xf32> -> vector<16x16xf32>
    %31 = arith.addf %30, %10 : vector<16x16xf32>
    %cst_10 = arith.constant dense<0xFF800000> : vector<16xf32>
    %32 = vector.multi_reduction <maximumf>, %31, %cst_10 [1] : vector<16x16xf32> to vector<16xf32>
    %33 = vector.shape_cast %32 : vector<16xf32> to vector<16x1xf32>
    %34 = vector.broadcast %33 : vector<16x1xf32> to vector<16x16xf32>
    %35 = arith.subf %31, %34 : vector<16x16xf32>
    %36 = math.exp %35 : vector<16x16xf32>
    %cst_11 = arith.constant dense<0.000000e+00> : vector<16xf32>
    %37 = vector.multi_reduction <add>, %36, %cst_11 [1] : vector<16x16xf32> to vector<16xf32>
    %38 = vector.shape_cast %37 : vector<16xf32> to vector<16x1xf32>
    %39 = tpu.reciprocal %38 : vector<16x1xf32> -> vector<16x1xf32>
    %cst_12 = arith.constant dense<0.000000e+00> : vector<16x8xf32>
    %40 = tpu.matmul %36, %29, %cst_12 {dimension_numbers = #tpu.dot_dimension_numbers<[1], [0], [0], [1], [0, 0, 1, 1], [], []>} : vector<16x16xf32>, vector<16x8xf32>, vector<16x8xf32> -> vector<16x8xf32>
    %41 = vector.broadcast %39 : vector<16x1xf32> to vector<16x8xf32>
    %42 = arith.mulf %40, %41 : vector<16x8xf32>
    %43 = vector.extract_strided_slice %7 {offsets = [0, 16], sizes = [16, 8], strides = [1, 1]} : vector<16x32xf32> to vector<16x8xf32>
    %44 = vector.extract_strided_slice %8 {offsets = [0, 16], sizes = [16, 8], strides = [1, 1]} : vector<16x32xf32> to vector<16x8xf32>
    %45 = vector.extract_strided_slice %9 {offsets = [0, 16], sizes = [16, 8], strides = [1, 1]} : vector<16x32xf32> to vector<16x8xf32>
    %cst_13 = arith.constant dense<0.000000e+00> : vector<16x16xf32>
    %46 = tpu.matmul %43, %44, %cst_13 {dimension_numbers = #tpu.dot_dimension_numbers<[1], [1], [0], [0], [0, 0, 1, 0], [], []>} : vector<16x8xf32>, vector<16x8xf32>, vector<16x16xf32> -> vector<16x16xf32>
    %47 = arith.addf %46, %10 : vector<16x16xf32>
    %cst_14 = arith.constant dense<0xFF800000> : vector<16xf32>
    %48 = vector.multi_reduction <maximumf>, %47, %cst_14 [1] : vector<16x16xf32> to vector<16xf32>
    %49 = vector.shape_cast %48 : vector<16xf32> to vector<16x1xf32>
    %50 = vector.broadcast %49 : vector<16x1xf32> to vector<16x16xf32>
    %51 = arith.subf %47, %50 : vector<16x16xf32>
    %52 = math.exp %51 : vector<16x16xf32>
    %cst_15 = arith.constant dense<0.000000e+00> : vector<16xf32>
    %53 = vector.multi_reduction <add>, %52, %cst_15 [1] : vector<16x16xf32> to vector<16xf32>
    %54 = vector.shape_cast %53 : vector<16xf32> to vector<16x1xf32>
    %55 = tpu.reciprocal %54 : vector<16x1xf32> -> vector<16x1xf32>
    %cst_16 = arith.constant dense<0.000000e+00> : vector<16x8xf32>
    %56 = tpu.matmul %52, %45, %cst_16 {dimension_numbers = #tpu.dot_dimension_numbers<[1], [0], [0], [1], [0, 0, 1, 1], [], []>} : vector<16x16xf32>, vector<16x8xf32>, vector<16x8xf32> -> vector<16x8xf32>
    %57 = vector.broadcast %55 : vector<16x1xf32> to vector<16x8xf32>
    %58 = arith.mulf %56, %57 : vector<16x8xf32>
    %59 = vector.extract_strided_slice %7 {offsets = [0, 24], sizes = [16, 8], strides = [1, 1]} : vector<16x32xf32> to vector<16x8xf32>
    %60 = vector.extract_strided_slice %8 {offsets = [0, 24], sizes = [16, 8], strides = [1, 1]} : vector<16x32xf32> to vector<16x8xf32>
    %61 = vector.extract_strided_slice %9 {offsets = [0, 24], sizes = [16, 8], strides = [1, 1]} : vector<16x32xf32> to vector<16x8xf32>
    %cst_17 = arith.constant dense<0.000000e+00> : vector<16x16xf32>
    %62 = tpu.matmul %59, %60, %cst_17 {dimension_numbers = #tpu.dot_dimension_numbers<[1], [1], [0], [0], [0, 0, 1, 0], [], []>} : vector<16x8xf32>, vector<16x8xf32>, vector<16x16xf32> -> vector<16x16xf32>
    %63 = arith.addf %62, %10 : vector<16x16xf32>
    %cst_18 = arith.constant dense<0xFF800000> : vector<16xf32>
    %64 = vector.multi_reduction <maximumf>, %63, %cst_18 [1] : vector<16x16xf32> to vector<16xf32>
    %65 = vector.shape_cast %64 : vector<16xf32> to vector<16x1xf32>
    %66 = vector.broadcast %65 : vector<16x1xf32> to vector<16x16xf32>
    %67 = arith.subf %63, %66 : vector<16x16xf32>
    %68 = math.exp %67 : vector<16x16xf32>
    %cst_19 = arith.constant dense<0.000000e+00> : vector<16xf32>
    %69 = vector.multi_reduction <add>, %68, %cst_19 [1] : vector<16x16xf32> to vector<16xf32>
    %70 = vector.shape_cast %69 : vector<16xf32> to vector<16x1xf32>
    %71 = tpu.reciprocal %70 : vector<16x1xf32> -> vector<16x1xf32>
    %cst_20 = arith.constant dense<0.000000e+00> : vector<16x8xf32>
    %72 = tpu.matmul %68, %61, %cst_20 {dimension_numbers = #tpu.dot_dimension_numbers<[1], [0], [0], [1], [0, 0, 1, 1], [], []>} : vector<16x16xf32>, vector<16x8xf32>, vector<16x8xf32> -> vector<16x8xf32>
    %73 = vector.broadcast %71 : vector<16x1xf32> to vector<16x8xf32>
    %74 = arith.mulf %72, %73 : vector<16x8xf32>
    %75 = tpu.concatenate %26, %42, %58, %74 in 1 : vector<16x8xf32>, vector<16x8xf32>, vector<16x8xf32>, vector<16x8xf32> -> vector<16x32xf32>
    %c0_21 = arith.constant 0 : index
    %c96_22 = arith.constant 96 : index
    %76 = vector.load %arg1[%c0_21, %c96_22] : memref<120x128xf32, #tpu.memory_space<vmem>>, vector<32x32xf32>
    %c96_23 = arith.constant 96 : index
    %c96_24 = arith.constant 96 : index
    %77 = vector.load %arg1[%c96_23, %c96_24] : memref<120x128xf32, #tpu.memory_space<vmem>>, vector<1x32xf32>
    %cst_25 = arith.constant dense<0.000000e+00> : vector<16x32xf32>
    %78 = tpu.matmul %75, %76, %cst_25 {dimension_numbers = #tpu.dot_dimension_numbers<[1], [0], [0], [1], [0, 0, 1, 1], [], []>} : vector<16x32xf32>, vector<32x32xf32>, vector<16x32xf32> -> vector<16x32xf32>
    %79 = vector.broadcast %77 : vector<1x32xf32> to vector<16x32xf32>
    %80 = arith.addf %78, %79 : vector<16x32xf32>
    %c97 = arith.constant 97 : index
    %c0_26 = arith.constant 0 : index
    %81 = vector.load %arg1[%c97, %c0_26] : memref<120x128xf32, #tpu.memory_space<vmem>>, vector<1x32xf32>
    %c97_27 = arith.constant 97 : index
    %c32 = arith.constant 32 : index
    %82 = vector.load %arg1[%c97_27, %c32] : memref<120x128xf32, #tpu.memory_space<vmem>>, vector<1x32xf32>
    %c97_28 = arith.constant 97 : index
    %c64 = arith.constant 64 : index
    %83 = vector.load %arg1[%c97_28, %c64] : memref<120x128xf32, #tpu.memory_space<vmem>>, vector<1x32xf32>
    %c97_29 = arith.constant 97 : index
    %c96_30 = arith.constant 96 : index
    %84 = vector.load %arg1[%c97_29, %c96_30] : memref<120x128xf32, #tpu.memory_space<vmem>>, vector<1x32xf32>
    %c98 = arith.constant 98 : index
    %c0_31 = arith.constant 0 : index
    %85 = vector.load %arg1[%c98, %c0_31] : memref<120x128xf32, #tpu.memory_space<vmem>>, vector<1x32xf32>
    %c99 = arith.constant 99 : index
    %c0_32 = arith.constant 0 : index
    %86 = vector.load %arg1[%c99, %c0_32] : memref<120x128xf32, #tpu.memory_space<vmem>>, vector<1x128xf32>
    %87 = arith.addf %80, %1 : vector<16x32xf32>
    %cst_33 = arith.constant dense<0.000000e+00> : vector<16xf32>
    %88 = vector.multi_reduction <add>, %87, %cst_33 [1] : vector<16x32xf32> to vector<16xf32>
    %89 = vector.shape_cast %88 : vector<16xf32> to vector<16x1xf32>
    %cst_34 = arith.constant 3.200000e+01 : f32
    %90 = vector.broadcast %cst_34 : f32 to vector<16x1xf32>
    %91 = arith.divf %89, %90 : vector<16x1xf32>
    %92 = vector.broadcast %91 : vector<16x1xf32> to vector<16x32xf32>
    %93 = arith.subf %87, %92 : vector<16x32xf32>
    %94 = arith.mulf %93, %93 : vector<16x32xf32>
    %cst_35 = arith.constant dense<0.000000e+00> : vector<16xf32>
    %95 = vector.multi_reduction <add>, %94, %cst_35 [1] : vector<16x32xf32> to vector<16xf32>
    %96 = vector.shape_cast %95 : vector<16xf32> to vector<16x1xf32>
    %cst_36 = arith.constant 3.200000e+01 : f32
    %97 = vector.broadcast %cst_36 : f32 to vector<16x1xf32>
    %98 = arith.divf %96, %97 : vector<16x1xf32>
    %cst_37 = arith.constant 9.99999974E-6 : f32
    %99 = vector.broadcast %cst_37 : f32 to vector<16x1xf32>
    %100 = arith.addf %98, %99 : vector<16x1xf32>
    %101 = math.rsqrt %100 : vector<16x1xf32>
    %102 = vector.broadcast %101 : vector<16x1xf32> to vector<16x32xf32>
    %103 = arith.mulf %93, %102 : vector<16x32xf32>
    %104 = vector.broadcast %81 : vector<1x32xf32> to vector<16x32xf32>
    %105 = arith.mulf %103, %104 : vector<16x32xf32>
    %106 = vector.broadcast %82 : vector<1x32xf32> to vector<16x32xf32>
    %107 = arith.addf %105, %106 : vector<16x32xf32>
    %c64_38 = arith.constant 64 : index
    %c0_39 = arith.constant 0 : index
    %108 = vector.load %arg1[%c64_38, %c0_39] : memref<120x128xf32, #tpu.memory_space<vmem>>, vector<32x128xf32>
    %cst_40 = arith.constant dense<0.000000e+00> : vector<16x128xf32>
    %109 = tpu.matmul %107, %108, %cst_40 {dimension_numbers = #tpu.dot_dimension_numbers<[1], [0], [0], [1], [0, 0, 1, 1], [], []>} : vector<16x32xf32>, vector<32x128xf32>, vector<16x128xf32> -> vector<16x128xf32>
    %110 = vector.broadcast %86 : vector<1x128xf32> to vector<16x128xf32>
    %111 = arith.addf %109, %110 : vector<16x128xf32>
    %cst_41 = arith.constant 0.000000e+00 : f32
    %112 = vector.broadcast %cst_41 : f32 to vector<16x128xf32>
    %113 = arith.maximumf %111, %112 : vector<16x128xf32>
    %c0_42 = arith.constant 0 : index
    %c0_43 = arith.constant 0 : index
    %114 = vector.load %arg2[%c0_42, %c0_43] : memref<128x32xf32, #tpu.memory_space<vmem>>, vector<128x32xf32>
    %cst_44 = arith.constant dense<0.000000e+00> : vector<16x32xf32>
    %115 = tpu.matmul %113, %114, %cst_44 {dimension_numbers = #tpu.dot_dimension_numbers<[1], [0], [0], [1], [0, 0, 1, 1], [], []>} : vector<16x128xf32>, vector<128x32xf32>, vector<16x32xf32> -> vector<16x32xf32>
    %116 = vector.broadcast %85 : vector<1x32xf32> to vector<16x32xf32>
    %117 = arith.addf %115, %116 : vector<16x32xf32>
    %118 = arith.addf %117, %107 : vector<16x32xf32>
    %cst_45 = arith.constant dense<0.000000e+00> : vector<16xf32>
    %119 = vector.multi_reduction <add>, %118, %cst_45 [1] : vector<16x32xf32> to vector<16xf32>
    %120 = vector.shape_cast %119 : vector<16xf32> to vector<16x1xf32>
    %cst_46 = arith.constant 3.200000e+01 : f32
    %121 = vector.broadcast %cst_46 : f32 to vector<16x1xf32>
    %122 = arith.divf %120, %121 : vector<16x1xf32>
    %123 = vector.broadcast %122 : vector<16x1xf32> to vector<16x32xf32>
    %124 = arith.subf %118, %123 : vector<16x32xf32>
    %125 = arith.mulf %124, %124 : vector<16x32xf32>
    %cst_47 = arith.constant dense<0.000000e+00> : vector<16xf32>
    %126 = vector.multi_reduction <add>, %125, %cst_47 [1] : vector<16x32xf32> to vector<16xf32>
    %127 = vector.shape_cast %126 : vector<16xf32> to vector<16x1xf32>
    %cst_48 = arith.constant 3.200000e+01 : f32
    %128 = vector.broadcast %cst_48 : f32 to vector<16x1xf32>
    %129 = arith.divf %127, %128 : vector<16x1xf32>
    %cst_49 = arith.constant 9.99999974E-6 : f32
    %130 = vector.broadcast %cst_49 : f32 to vector<16x1xf32>
    %131 = arith.addf %129, %130 : vector<16x1xf32>
    %132 = math.rsqrt %131 : vector<16x1xf32>
    %133 = vector.broadcast %132 : vector<16x1xf32> to vector<16x32xf32>
    %134 = arith.mulf %124, %133 : vector<16x32xf32>
    %135 = vector.broadcast %83 : vector<1x32xf32> to vector<16x32xf32>
    %136 = arith.mulf %134, %135 : vector<16x32xf32>
    %137 = vector.broadcast %84 : vector<1x32xf32> to vector<16x32xf32>
    %138 = arith.addf %136, %137 : vector<16x32xf32>
    %c0_50 = arith.constant 0 : index
    %c0_51 = arith.constant 0 : index
    %139 = vector.load %arg3[%c0_50, %c0_51] : memref<16x32xf32, #tpu.memory_space<vmem>>, vector<16x32xf32>
    tpu.vector_store %arg3[%c0_50, %c0_51], %138 {strides = array<i32>} : memref<16x32xf32, #tpu.memory_space<vmem>>, vector<16x32xf32>,
    return
  }
}

</mosaic_0001>

<llo_original>
// kernel: decoder_forward.1
$region0: #{decoder_forward.1}
  #allocation0 [shape = 'u32[]', space=smem, size = 0x4, offset = 0x4, fixed_abs, tag = 'smem constant byte address 0x4 - core index']
  #allocation1 [shape = 'u32[144,128]{1,0:T(1,128)}', space=vmem, size = 0x12000, scoped, tag = 'internal scratch']
  %s0 = inlined_call_operand.vmem [shape: f32[16,64], index: 0, kind: input, shape index: {}]
  %s1 = inlined_call_operand.vmem [shape: f32[120,128], index: 1, kind: input, shape index: {}]
  %s2 = inlined_call_operand.vmem [shape: f32[128,32], index: 2, kind: input, shape index: {}]
  %s3 = inlined_call_operand.vmem [shape: f32[16,32], index: 3, kind: output, shape index: {}]
  %s4 = sld [smem:[#allocation0]]
  $region22: #{decoder_forward.1} parent=0
    _
  %s6 = ssub.s32 1, %s4
  %s7 = scalar_select 0, %s6, %s4
  // Predicated region
  $region2: #{decoder_forward.1} parent=0 // pred_check
    _
  $region3: #{decoder_forward.1} parent=0 // pred_check_branch
    %9 = sbr.rel (0) target = $region5
  $region4: #{decoder_forward.1} parent=0 // pred_region
    _
  $region5: #{decoder_forward.1} parent=0 // pred_fallthru
    _
  // Predicated region
  $region6: #{decoder_forward.1} parent=0 // pred_check
    _
  $region7: #{decoder_forward.1} parent=0 // pred_check_branch
    %11 = sbr.rel (0) target = $region9
  $region8: #{decoder_forward.1} parent=0 // pred_region
    _
  $region9: #{decoder_forward.1} parent=0 // pred_fallthru
    _
  // Predicated region
  $region10: #{decoder_forward.1} parent=0 // pred_check
    _
  $region11: #{decoder_forward.1} parent=0 // pred_check_branch
    %13 = sbr.rel (0) target = $region13
  $region12: #{decoder_forward.1} parent=0 // pred_region
    _
  $region13: #{decoder_forward.1} parent=0 // pred_fallthru
    _
  %v14 = vld [vmem:[%s0] sm:$0xff]
  %v15 = vld [vmem:[%s0 + $0x8] sm:$0xff]
  %v16 = vld [vmem:[%s1] sm:$0xff]
  %v17 = vld [vmem:[%s1 + $0x8] sm:$0xff]
  %v18 = vld [vmem:[%s1 + $0x10] sm:$0xff]
  %v19 = vld [vmem:[%s1 + $0x18] sm:$0xff]
  %v20 = vld [vmem:[%s1 + $0x20] sm:$0xff]
  %v21 = vld [vmem:[%s1 + $0x28] sm:$0xff]
  %v22 = vld [vmem:[%s1 + $0x30] sm:$0xff]
  %v23 = vld [vmem:[%s1 + $0x38] sm:$0xff]
  %v24 = vld [vmem:[%s1 + $0x60] sm:$0x1]
  %v25 = vlaneseq
  %v26 = vshrl.u32 %v25, 7
  %v27 = vsub.s32 0, %v26
  %v28 = vrot.slane %v24, %v27
  %vm29 = vcmask 523264
  %v31 = vsel %vm29, %v14, 0
  %v34 = vsel %vm29, %v15, 0
  %36 = vmatprep.subr.mxu0 0.0
  %37 = vmatpush1.msra.mxu0 0.0
  %38 = vmatprep.subr.mxu0 0.0
  %39 = vmatpush1.msra.mxu0 0.0
  %40 = vmatprep.subr.mxu0 0.0
  %41 = vmatpush1.msra.mxu0 0.0
  %42 = vmatprep.subr.mxu0 0.0
  %43 = vmatpush1.msra.mxu0 0.0
  %44 = vmatprep.subr.mxu0 0.0
  %45 = vmatpush1.msra.mxu0 0.0
  %46 = vmatprep.subr.mxu0 0.0
  %47 = vmatpush1.msra.mxu0 0.0
  %48 = vmatprep.subr.mxu0 0.0
  %49 = vmatpush1.msra.mxu0 0.0
  %50 = vmatprep.subr.mxu0 0.0
  %51 = vmatpush1.msra.mxu0 0.0
  %52 = vmatprep.subr.mxu0 0.0
  %53 = vmatpush1.msra.mxu0 %v23
  %54 = vmatprep.subr.mxu0 0.0
  %55 = vmatpush1.msra.mxu0 %v22
  %56 = vmatprep.subr.mxu0 0.0
  %57 = vmatpush1.msra.mxu0 %v21
  %58 = vmatprep.subr.mxu0 0.0
  %59 = vmatpush1.msra.mxu0 %v20
  %60 = vmatprep.subr.mxu0 0.0
  %61 = vmatpush1.msra.mxu0 %v19
  %62 = vmatprep.subr.mxu0 0.0
  %63 = vmatpush1.msra.mxu0 %v18
  %64 = vmatprep.subr.mxu0 0.0
  %65 = vmatpush1.msra.mxu0 %v17
  %66 = vmatprep.subr.mxu0 0.0
  %67 = vmatpush1.msra.mxu0 %v16
  %68 = vmatprep.subr.mxu0 0.0
  %69 = vmatpush2.msra.mxu0 0.0
  %70 = vmatprep.subr.mxu0 0.0
  %71 = vmatpush2.msra.mxu0 0.0
  %72 = vmatprep.subr.mxu0 0.0
  %73 = vmatpush2.msra.mxu0 0.0
  %74 = vmatprep.subr.mxu0 0.0
  %75 = vmatpush2.msra.mxu0 0.0
  %76 = vmatprep.subr.mxu0 0.0
  %77 = vmatpush2.msra.mxu0 0.0
  %78 = vmatprep.subr.mxu0 0.0
  %79 = vmatpush2.msra.mxu0 0.0
  %80 = vmatprep.subr.mxu0 0.0
  %81 = vmatpush2.msra.mxu0 0.0
  %82 = vmatprep.subr.mxu0 0.0
  %83 = vmatpush2.msra.mxu0 0.0
  %84 = vmatprep.subr.mxu0 0.0
  %85 = vmatpush2.msra.mxu0 0.0
  %86 = vmatprep.subr.mxu0 0.0
  %87 = vmatpush2.msra.mxu0 0.0
  %88 = vmatprep.subr.mxu0 0.0
  %89 = vmatpush2.msra.mxu0 0.0
  %90 = vmatprep.subr.mxu0 0.0
  %91 = vmatpush2.msra.mxu0 0.0
  %92 = vmatprep.subr.mxu0 0.0
  %93 = vmatpush2.msra.mxu0 0.0
  %94 = vmatprep.subr.mxu0 0.0
  %95 = vmatpush2.msra.mxu0 0.0
  %96 = vmatprep.subr.mxu0 0.0
  %97 = vmatpush2.msra.mxu0 0.0
  %98 = vmatprep.subr.mxu0 0.0
  %99 = vmatpush2.msra.mxu0 0.0
  %100 = vmatprep.mubr.f32.mxu0 0.0
  %101 = vmatmul.mubr.f32.gmra.mxu0 %v31
  %v102 = vpop.f32.mrf.mxu0
  %v103 = vadd.f32 %v28, %v102
  %v104 = vpop.f32.mrf.mxu0
  %105 = vmatprep.mubr.f32.mxu0 0.0
  %106 = vmatmul.mubr.f32.gmra.mxu0 %v34
  %v107 = vpop.f32.mrf.mxu0
  %v108 = vadd.f32 %v28, %v107
  %v109 = vpop.f32.mrf.mxu0
  %110 = vdwg.mxu0
  %v111 = vld [vmem:[%s1 + $0x68] sm:$0xff]
  %v112 = vld [vmem:[%s1 + $0x70] sm:$0xff]
  %115 = vrot.lane.b32.xlu0 %v103, 96
  %v116 = vpop.permute.xlu0 %115
  %117 = vrot.lane.b32.xlu0 %v108, 96
  %v118 = vpop.permute.xlu0 %117
  %vm119 = vcmask 64512
  %v120 = vsel %vm119, %v103, 0
  %v122 = vsel %vm119, %v108, 0
  %v124 = vsel %vm119, %v116, 0
  %v126 = vsel %vm119, %v118, 0
  %128 = vmatprep.subr.mxu0 0.0
  %129 = vmatpush1.xpose.msra.mxu0 0.0
  %130 = vmatprep.subr.mxu0 0.0
  %131 = vmatpush1.xpose.msra.mxu0 0.0
  %132 = vmatprep.subr.mxu0 0.0
  %133 = vmatpush1.xpose.msra.mxu0 0.0
  %134 = vmatprep.subr.mxu0 0.0
  %135 = vmatpush1.xpose.msra.mxu0 0.0
  %136 = vmatprep.subr.mxu0 0.0
  %137 = vmatpush1.xpose.msra.mxu0 0.0
  %138 = vmatprep.subr.mxu0 0.0
  %139 = vmatpush1.xpose.msra.mxu0 0.0
  %140 = vmatprep.subr.mxu0 0.0
  %141 = vmatpush1.xpose.msra.mxu0 0.0
  %142 = vmatprep.subr.mxu0 0.0
  %143 = vmatpush1.xpose.msra.mxu0 0.0
  %144 = vmatprep.subr.mxu0 0.0
  %145 = vmatpush1.xpose.msra.mxu0 0.0
  %146 = vmatprep.subr.mxu0 0.0
  %147 = vmatpush1.xpose.msra.mxu0 0.0
  %148 = vmatprep.subr.mxu0 0.0
  %149 = vmatpush1.xpose.msra.mxu0 0.0
  %150 = vmatprep.subr.mxu0 0.0
  %151 = vmatpush1.xpose.msra.mxu0 0.0
  %152 = vmatprep.subr.mxu0 0.0
  %153 = vmatpush1.xpose.msra.mxu0 0.0
  %154 = vmatprep.subr.mxu0 0.0
  %155 = vmatpush1.xpose.msra.mxu0 0.0
  %156 = vmatprep.subr.mxu0 0.0
  %157 = vmatpush1.xpose.msra.mxu0 %v126
  %158 = vmatprep.subr.mxu0 0.0
  %159 = vmatpush1.xpose.msra.mxu0 %v124
  %160 = vmatprep.subr.mxu0 0.0
  %161 = vmatpush2.xpose.msra.mxu0 0.0
  %162 = vmatprep.subr.mxu0 0.0
  %163 = vmatpush2.xpose.msra.mxu0 0.0
  %164 = vmatprep.subr.mxu0 0.0
  %165 = vmatpush2.xpose.msra.mxu0 0.0
  %166 = vmatprep.subr.mxu0 0.0
  %167 = vmatpush2.xpose.msra.mxu0 0.0
  %168 = vmatprep.subr.mxu0 0.0
  %169 = vmatpush2.xpose.msra.mxu0 0.0
  %170 = vmatprep.subr.mxu0 0.0
  %171 = vmatpush2.xpose.msra.mxu0 0.0
  %172 = vmatprep.subr.mxu0 0.0
  %173 = vmatpush2.xpose.msra.mxu0 0.0
  %174 = vmatprep.subr.mxu0 0.0
  %175 = vmatpush2.xpose.msra.mxu0 0.0
  %176 = vmatprep.subr.mxu0 0.0
  %177 = vmatpush2.xpose.msra.mxu0 0.0
  %178 = vmatprep.subr.mxu0 0.0
  %179 = vmatpush2.xpose.msra.mxu0 0.0
  %180 = vmatprep.subr.mxu0 0.0
  %181 = vmatpush2.xpose.msra.mxu0 0.0
  %182 = vmatprep.subr.mxu0 0.0
  %183 = vmatpush2.xpose.msra.mxu0 0.0
  %184 = vmatprep.subr.mxu0 0.0
  %185 = vmatpush2.xpose.msra.mxu0 0.0
  %186 = vmatprep.subr.mxu0 0.0
  %187 = vmatpush2.xpose.msra.mxu0 0.0
  %188 = vmatprep.subr.mxu0 0.0
  %189 = vmatpush2.xpose.msra.mxu0 0.0
  %190 = vmatprep.subr.mxu0 0.0
  %191 = vmatpush2.xpose.msra.mxu0 0.0
  %192 = vmatprep.mubr.f32.mxu0 0.0
  %193 = vmatmul.mubr.f32.gmra.mxu0 %v120
  %v194 = vpop.f32.mrf.mxu0
  %v195 = vadd.f32 %v111, %v194
  %v196 = vpop.f32.mrf.mxu0
  %197 = vmatprep.mubr.f32.mxu0 0.0
  %198 = vmatmul.mubr.f32.gmra.mxu0 %v122
  %v199 = vpop.f32.mrf.mxu0
  %v200 = vadd.f32 %v112, %v199
  %v201 = vpop.f32.mrf.mxu0
  %202 = vdwg.mxu0
  %vm203 = vcmask 130048
  %v204 = vsel %vm203, %v195, -inf
  %205 = vmax.xlane.f32.xlu0 %v204
  %v206 = vpop.xlane.xlu0 %205
  %v207 = vsel %vm203, %v200, -inf
  %208 = vmax.xlane.f32.xlu0 %v207
  %v209 = vpop.xlane.xlu0 %208
  %v210 = vsub.f32 %v195, %v206
  %v211 = vsub.f32 %v200, %v209
  %v212 = vmul.f32 %v210, 1.442695
  %v213 = vpow.pop %v212
  %v214 = vmul.f32 %v211, 1.442695
  %v215 = vpow.pop %v214
  %v216 = vsel %vm203, %v213, 0.0
  %217 = vadd.xlane.f32.xlu0 %v216
  %v218 = vpop.xlane.xlu0 %217
  %v219 = vsel %vm203, %v215, 0.0
  %220 = vadd.xlane.f32.xlu0 %v219
  %v221 = vpop.xlane.xlu0 %220
  %v222 = vrcp.pop %v218
  %v223 = vrcp.pop %v221
  %224 = vrot.lane.b32.xlu0 %v103, 64
  %v225 = vpop.permute.xlu0 %224
  %226 = vrot.lane.b32.xlu0 %v108, 64
  %v227 = vpop.permute.xlu0 %226
  %v231 = vsel %vm203, %v213, 0
  %v234 = vsel %vm203, %v215, 0
  %236 = vmatprep.subr.mxu0 0.0
  %237 = vmatpush1.msra.mxu0 0.0
  %238 = vmatprep.subr.mxu0 0.0
  %239 = vmatpush1.msra.mxu0 0.0
  %240 = vmatprep.subr.mxu0 0.0
  %241 = vmatpush1.msra.mxu0 0.0
  %242 = vmatprep.subr.mxu0 0.0
  %243 = vmatpush1.msra.mxu0 0.0
  %244 = vmatprep.subr.mxu0 0.0
  %245 = vmatpush1.msra.mxu0 0.0
  %246 = vmatprep.subr.mxu0 0.0
  %247 = vmatpush1.msra.mxu0 0.0
  %248 = vmatprep.subr.mxu0 0.0
  %249 = vmatpush1.msra.mxu0 0.0
  %250 = vmatprep.subr.mxu0 0.0
  %251 = vmatpush1.msra.mxu0 0.0
  %252 = vmatprep.subr.mxu0 0.0
  %253 = vmatpush1.msra.mxu0 0.0
  %254 = vmatprep.subr.mxu0 0.0
  %255 = vmatpush1.msra.mxu0 0.0
  %256 = vmatprep.subr.mxu0 0.0
  %257 = vmatpush1.msra.mxu0 0.0
  %258 = vmatprep.subr.mxu0 0.0
  %259 = vmatpush1.msra.mxu0 0.0
  %260 = vmatprep.subr.mxu0 0.0
  %261 = vmatpush1.msra.mxu0 0.0
  %262 = vmatprep.subr.mxu0 0.0
  %263 = vmatpush1.msra.mxu0 0.0
  %264 = vmatprep.subr.mxu0 0.0
  %265 = vmatpush1.msra.mxu0 %v227
  %266 = vmatprep.subr.mxu0 0.0
  %267 = vmatpush1.msra.mxu0 %v225
  %268 = vmatprep.subr.mxu0 0.0
  %269 = vmatpush2.msra.mxu0 0.0
  %270 = vmatprep.subr.mxu0 0.0
  %271 = vmatpush2.msra.mxu0 0.0
  %272 = vmatprep.subr.mxu0 0.0
  %273 = vmatpush2.msra.mxu0 0.0
  %274 = vmatprep.subr.mxu0 0.0
  %275 = vmatpush2.msra.mxu0 0.0
  %276 = vmatprep.subr.mxu0 0.0
  %277 = vmatpush2.msra.mxu0 0.0
  %278 = vmatprep.subr.mxu0 0.0
  %279 = vmatpush2.msra.mxu0 0.0
  %280 = vmatprep.subr.mxu0 0.0
  %281 = vmatpush2.msra.mxu0 0.0
  %282 = vmatprep.subr.mxu0 0.0
  %283 = vmatpush2.msra.mxu0 0.0
  %284 = vmatprep.subr.mxu0 0.0
  %285 = vmatpush2.msra.mxu0 0.0
  %286 = vmatprep.subr.mxu0 0.0
  %287 = vmatpush2.msra.mxu0 0.0
  %288 = vmatprep.subr.mxu0 0.0
  %289 = vmatpush2.msra.mxu0 0.0
  %290 = vmatprep.subr.mxu0 0.0
  %291 = vmatpush2.msra.mxu0 0.0
  %292 = vmatprep.subr.mxu0 0.0
  %293 = vmatpush2.msra.mxu0 0.0
  %294 = vmatprep.subr.mxu0 0.0
  %295 = vmatpush2.msra.mxu0 0.0
  %296 = vmatprep.subr.mxu0 0.0
  %297 = vmatpush2.msra.mxu0 0.0
  %298 = vmatprep.subr.mxu0 0.0
  %299 = vmatpush2.msra.mxu0 0.0
  %300 = vmatprep.mubr.f32.mxu0 0.0
  %301 = vmatmul.mubr.f32.gmra.mxu0 %v231
  %v302 = vpop.f32.mrf.mxu0
  %v303 = vadd.f32 0.0, %v302
  %v304 = vpop.f32.mrf.mxu0
  %305 = vmatprep.mubr.f32.mxu0 0.0
  %306 = vmatmul.mubr.f32.gmra.mxu0 %v234
  %v307 = vpop.f32.mrf.mxu0
  %v308 = vadd.f32 0.0, %v307
  %v309 = vpop.f32.mrf.mxu0
  %310 = vdwg.mxu0
  %v311 = vmul.f32 %v303, %v222
  %v312 = vmul.f32 %v308, %v223
  %313 = vrot.lane.b32.xlu0 %v103, 120
  %v314 = vpop.permute.xlu0 %313
  %315 = vrot.lane.b32.xlu0 %v108, 120
  %v316 = vpop.permute.xlu0 %315
  %317 = vrot.lane.b32.xlu0 %v103, 88
  %v318 = vpop.permute.xlu0 %317
  %319 = vrot.lane.b32.xlu0 %v108, 88
  %v320 = vpop.permute.xlu0 %319
  %v321 = vsel %vm119, %v314, 0
  %v323 = vsel %vm119, %v316, 0
  %v325 = vsel %vm119, %v318, 0
  %v327 = vsel %vm119, %v320, 0
  %329 = vmatprep.subr.mxu0 0.0
  %330 = vmatpush1.xpose.msra.mxu0 0.0
  %331 = vmatprep.subr.mxu0 0.0
  %332 = vmatpush1.xpose.msra.mxu0 0.0
  %333 = vmatprep.subr.mxu0 0.0
  %334 = vmatpush1.xpose.msra.mxu0 0.0
  %335 = vmatprep.subr.mxu0 0.0
  %336 = vmatpush1.xpose.msra.mxu0 0.0
  %337 = vmatprep.subr.mxu0 0.0
  %338 = vmatpush1.xpose.msra.mxu0 0.0
  %339 = vmatprep.subr.mxu0 0.0
  %340 = vmatpush1.xpose.msra.mxu0 0.0
  %341 = vmatprep.subr.mxu0 0.0
  %342 = vmatpush1.xpose.msra.mxu0 0.0
  %343 = vmatprep.subr.mxu0 0.0
  %344 = vmatpush1.xpose.msra.mxu0 0.0
  %345 = vmatprep.subr.mxu0 0.0
  %346 = vmatpush1.xpose.msra.mxu0 0.0
  %347 = vmatprep.subr.mxu0 0.0
  %348 = vmatpush1.xpose.msra.mxu0 0.0
  %349 = vmatprep.subr.mxu0 0.0
  %350 = vmatpush1.xpose.msra.mxu0 0.0
  %351 = vmatprep.subr.mxu0 0.0
  %352 = vmatpush1.xpose.msra.mxu0 0.0
  %353 = vmatprep.subr.mxu0 0.0
  %354 = vmatpush1.xpose.msra.mxu0 0.0
  %355 = vmatprep.subr.mxu0 0.0
  %356 = vmatpush1.xpose.msra.mxu0 0.0
  %357 = vmatprep.subr.mxu0 0.0
  %358 = vmatpush1.xpose.msra.mxu0 %v327
  %359 = vmatprep.subr.mxu0 0.0
  %360 = vmatpush1.xpose.msra.mxu0 %v325
  %361 = vmatprep.subr.mxu0 0.0
  %362 = vmatpush2.xpose.msra.mxu0 0.0
  %363 = vmatprep.subr.mxu0 0.0
  %364 = vmatpush2.xpose.msra.mxu0 0.0
  %365 = vmatprep.subr.mxu0 0.0
  %366 = vmatpush2.xpose.msra.mxu0 0.0
  %367 = vmatprep.subr.mxu0 0.0
  %368 = vmatpush2.xpose.msra.mxu0 0.0
  %369 = vmatprep.subr.mxu0 0.0
  %370 = vmatpush2.xpose.msra.mxu0 0.0
  %371 = vmatprep.subr.mxu0 0.0
  %372 = vmatpush2.xpose.msra.mxu0 0.0
  %373 = vmatprep.subr.mxu0 0.0
  %374 = vmatpush2.xpose.msra.mxu0 0.0
  %375 = vmatprep.subr.mxu0 0.0
  %376 = vmatpush2.xpose.msra.mxu0 0.0
  %377 = vmatprep.subr.mxu0 0.0
  %378 = vmatpush2.xpose.msra.mxu0 0.0
  %379 = vmatprep.subr.mxu0 0.0
  %380 = vmatpush2.xpose.msra.mxu0 0.0
  %381 = vmatprep.subr.mxu0 0.0
  %382 = vmatpush2.xpose.msra.mxu0 0.0
  %383 = vmatprep.subr.mxu0 0.0
  %384 = vmatpush2.xpose.msra.mxu0 0.0
  %385 = vmatprep.subr.mxu0 0.0
  %386 = vmatpush2.xpose.msra.mxu0 0.0
  %387 = vmatprep.subr.mxu0 0.0
  %388 = vmatpush2.xpose.msra.mxu0 0.0
  %389 = vmatprep.subr.mxu0 0.0
  %390 = vmatpush2.xpose.msra.mxu0 0.0
  %391 = vmatprep.subr.mxu0 0.0
  %392 = vmatpush2.xpose.msra.mxu0 0.0
  %393 = vmatprep.mubr.f32.mxu0 0.0
  %394 = vmatmul.mubr.f32.gmra.mxu0 %v321
  %v395 = vpop.f32.mrf.mxu0
  %v396 = vadd.f32 %v111, %v395
  %v397 = vpop.f32.mrf.mxu0
  %398 = vmatprep.mubr.f32.mxu0 0.0
  %399 = vmatmul.mubr.f32.gmra.mxu0 %v323
  %v400 = vpop.f32.mrf.mxu0
  %v401 = vadd.f32 %v112, %v400
  %v402 = vpop.f32.mrf.mxu0
  %403 = vdwg.mxu0
  %v404 = vsel %vm203, %v396, -inf
  %405 = vmax.xlane.f32.xlu0 %v404
  %v406 = vpop.xlane.xlu0 %405
  %v407 = vsel %vm203, %v401, -inf
  %408 = vmax.xlane.f32.xlu0 %v407
  %v409 = vpop.xlane.xlu0 %408
  %v410 = vsub.f32 %v396, %v406
  %v411 = vsub.f32 %v401, %v409
  %v412 = vmul.f32 %v410, 1.442695
  %v413 = vpow.pop %v412
  %v414 = vmul.f32 %v411, 1.442695
  %v415 = vpow.pop %v414
  %v416 = vsel %vm203, %v413, 0.0
  %417 = vadd.xlane.f32.xlu0 %v416
  %v418 = vpop.xlane.xlu0 %417
  %v419 = vsel %vm203, %v415, 0.0
  %420 = vadd.xlane.f32.xlu0 %v419
  %v421 = vpop.xlane.xlu0 %420
  %v422 = vrcp.pop %v418
  %v423 = vrcp.pop %v421
  %424 = vrot.lane.b32.xlu0 %v103, 56
  %v425 = vpop.permute.xlu0 %424
  %426 = vrot.lane.b32.xlu0 %v108, 56
  %v427 = vpop.permute.xlu0 %426
  %v431 = vsel %vm203, %v413, 0
  %v434 = vsel %vm203, %v415, 0
  %436 = vmatprep.subr.mxu0 0.0
  %437 = vmatpush1.msra.mxu0 0.0
  %438 = vmatprep.subr.mxu0 0.0
  %439 = vmatpush1.msra.mxu0 0.0
  %440 = vmatprep.subr.mxu0 0.0
  %441 = vmatpush1.msra.mxu0 0.0
  %442 = vmatprep.subr.mxu0 0.0
  %443 = vmatpush1.msra.mxu0 0.0
  %444 = vmatprep.subr.mxu0 0.0
  %445 = vmatpush1.msra.mxu0 0.0
  %446 = vmatprep.subr.mxu0 0.0
  %447 = vmatpush1.msra.mxu0 0.0
  %448 = vmatprep.subr.mxu0 0.0
  %449 = vmatpush1.msra.mxu0 0.0
  %450 = vmatprep.subr.mxu0 0.0
  %451 = vmatpush1.msra.mxu0 0.0
  %452 = vmatprep.subr.mxu0 0.0
  %453 = vmatpush1.msra.mxu0 0.0
  %454 = vmatprep.subr.mxu0 0.0
  %455 = vmatpush1.msra.mxu0 0.0
  %456 = vmatprep.subr.mxu0 0.0
  %457 = vmatpush1.msra.mxu0 0.0
  %458 = vmatprep.subr.mxu0 0.0
  %459 = vmatpush1.msra.mxu0 0.0
  %460 = vmatprep.subr.mxu0 0.0
  %461 = vmatpush1.msra.mxu0 0.0
  %462 = vmatprep.subr.mxu0 0.0
  %463 = vmatpush1.msra.mxu0 0.0
  %464 = vmatprep.subr.mxu0 0.0
  %465 = vmatpush1.msra.mxu0 %v427
  %466 = vmatprep.subr.mxu0 0.0
  %467 = vmatpush1.msra.mxu0 %v425
  %468 = vmatprep.subr.mxu0 0.0
  %469 = vmatpush2.msra.mxu0 0.0
  %470 = vmatprep.subr.mxu0 0.0
  %471 = vmatpush2.msra.mxu0 0.0
  %472 = vmatprep.subr.mxu0 0.0
  %473 = vmatpush2.msra.mxu0 0.0
  %474 = vmatprep.subr.mxu0 0.0
  %475 = vmatpush2.msra.mxu0 0.0
  %476 = vmatprep.subr.mxu0 0.0
  %477 = vmatpush2.msra.mxu0 0.0
  %478 = vmatprep.subr.mxu0 0.0
  %479 = vmatpush2.msra.mxu0 0.0
  %480 = vmatprep.subr.mxu0 0.0
  %481 = vmatpush2.msra.mxu0 0.0
  %482 = vmatprep.subr.mxu0 0.0
  %483 = vmatpush2.msra.mxu0 0.0
  %484 = vmatprep.subr.mxu0 0.0
  %485 = vmatpush2.msra.mxu0 0.0
  %486 = vmatprep.subr.mxu0 0.0
  %487 = vmatpush2.msra.mxu0 0.0
  %488 = vmatprep.subr.mxu0 0.0
  %489 = vmatpush2.msra.mxu0 0.0
  %490 = vmatprep.subr.mxu0 0.0
  %491 = vmatpush2.msra.mxu0 0.0
  %492 = vmatprep.subr.mxu0 0.0
  %493 = vmatpush2.msra.mxu0 0.0
  %494 = vmatprep.subr.mxu0 0.0
  %495 = vmatpush2.msra.mxu0 0.0
  %496 = vmatprep.subr.mxu0 0.0
  %497 = vmatpush2.msra.mxu0 0.0
  %498 = vmatprep.subr.mxu0 0.0
  %499 = vmatpush2.msra.mxu0 0.0
  %500 = vmatprep.mubr.f32.mxu0 0.0
  %501 = vmatmul.mubr.f32.gmra.mxu0 %v431
  %v502 = vpop.f32.mrf.mxu0
  %v503 = vadd.f32 0.0, %v502
  %v504 = vpop.f32.mrf.mxu0
  %505 = vmatprep.mubr.f32.mxu0 0.0
  %506 = vmatmul.mubr.f32.gmra.mxu0 %v434
  %v507 = vpop.f32.mrf.mxu0
  %v508 = vadd.f32 0.0, %v507
  %v509 = vpop.f32.mrf.mxu0
  %510 = vdwg.mxu0
  %v511 = vmul.f32 %v503, %v422
  %v512 = vmul.f32 %v508, %v423
  %513 = vrot.lane.b32.xlu0 %v103, 112
  %v514 = vpop.permute.xlu0 %513
  %515 = vrot.lane.b32.xlu0 %v108, 112
  %v516 = vpop.permute.xlu0 %515
  %517 = vrot.lane.b32.xlu0 %v103, 80
  %v518 = vpop.permute.xlu0 %517
  %519 = vrot.lane.b32.xlu0 %v108, 80
  %v520 = vpop.permute.xlu0 %519
  %v521 = vsel %vm119, %v514, 0
  %v523 = vsel %vm119, %v516, 0
  %v525 = vsel %vm119, %v518, 0
  %v527 = vsel %vm119, %v520, 0
  %529 = vmatprep.subr.mxu0 0.0
  %530 = vmatpush1.xpose.msra.mxu0 0.0
  %531 = vmatprep.subr.mxu0 0.0
  %532 = vmatpush1.xpose.msra.mxu0 0.0
  %533 = vmatprep.subr.mxu0 0.0
  %534 = vmatpush1.xpose.msra.mxu0 0.0
  %535 = vmatprep.subr.mxu0 0.0
  %536 = vmatpush1.xpose.msra.mxu0 0.0
  %537 = vmatprep.subr.mxu0 0.0
  %538 = vmatpush1.xpose.msra.mxu0 0.0
  %539 = vmatprep.subr.mxu0 0.0
  %540 = vmatpush1.xpose.msra.mxu0 0.0
  %541 = vmatprep.subr.mxu0 0.0
  %542 = vmatpush1.xpose.msra.mxu0 0.0
  %543 = vmatprep.subr.mxu0 0.0
  %544 = vmatpush1.xpose.msra.mxu0 0.0
  %545 = vmatprep.subr.mxu0 0.0
  %546 = vmatpush1.xpose.msra.mxu0 0.0
  %547 = vmatprep.subr.mxu0 0.0
  %548 = vmatpush1.xpose.msra.mxu0 0.0
  %549 = vmatprep.subr.mxu0 0.0
  %550 = vmatpush1.xpose.msra.mxu0 0.0
  %551 = vmatprep.subr.mxu0 0.0
  %552 = vmatpush1.xpose.msra.mxu0 0.0
  %553 = vmatprep.subr.mxu0 0.0
  %554 = vmatpush1.xpose.msra.mxu0 0.0
  %555 = vmatprep.subr.mxu0 0.0
  %556 = vmatpush1.xpose.msra.mxu0 0.0
  %557 = vmatprep.subr.mxu0 0.0
  %558 = vmatpush1.xpose.msra.mxu0 %v527
  %559 = vmatprep.subr.mxu0 0.0
  %560 = vmatpush1.xpose.msra.mxu0 %v525
  %561 = vmatprep.subr.mxu0 0.0
  %562 = vmatpush2.xpose.msra.mxu0 0.0
  %563 = vmatprep.subr.mxu0 0.0
  %564 = vmatpush2.xpose.msra.mxu0 0.0
  %565 = vmatprep.subr.mxu0 0.0
  %566 = vmatpush2.xpose.msra.mxu0 0.0
  %567 = vmatprep.subr.mxu0 0.0
  %568 = vmatpush2.xpose.msra.mxu0 0.0
  %569 = vmatprep.subr.mxu0 0.0
  %570 = vmatpush2.xpose.msra.mxu0 0.0
  %571 = vmatprep.subr.mxu0 0.0
  %572 = vmatpush2.xpose.msra.mxu0 0.0
  %573 = vmatprep.subr.mxu0 0.0
  %574 = vmatpush2.xpose.msra.mxu0 0.0
  %575 = vmatprep.subr.mxu0 0.0
  %576 = vmatpush2.xpose.msra.mxu0 0.0
  %577 = vmatprep.subr.mxu0 0.0
  %578 = vmatpush2.xpose.msra.mxu0 0.0
  %579 = vmatprep.subr.mxu0 0.0
  %580 = vmatpush2.xpose.msra.mxu0 0.0
  %581 = vmatprep.subr.mxu0 0.0
  %582 = vmatpush2.xpose.msra.mxu0 0.0
  %583 = vmatprep.subr.mxu0 0.0
  %584 = vmatpush2.xpose.msra.mxu0 0.0
  %585 = vmatprep.subr.mxu0 0.0
  %586 = vmatpush2.xpose.msra.mxu0 0.0
  %587 = vmatprep.subr.mxu0 0.0
  %588 = vmatpush2.xpose.msra.mxu0 0.0
  %589 = vmatprep.subr.mxu0 0.0
  %590 = vmatpush2.xpose.msra.mxu0 0.0
  %591 = vmatprep.subr.mxu0 0.0
  %592 = vmatpush2.xpose.msra.mxu0 0.0
  %593 = vmatprep.mubr.f32.mxu0 0.0
  %594 = vmatmul.mubr.f32.gmra.mxu0 %v521
  %v595 = vpop.f32.mrf.mxu0
  %v596 = vadd.f32 %v111, %v595
  %v597 = vpop.f32.mrf.mxu0
  %598 = vmatprep.mubr.f32.mxu0 0.0
  %599 = vmatmul.mubr.f32.gmra.mxu0 %v523
  %v600 = vpop.f32.mrf.mxu0
  %v601 = vadd.f32 %v112, %v600
  %v602 = vpop.f32.mrf.mxu0
  %603 = vdwg.mxu0
  %v604 = vsel %vm203, %v596, -inf
  %605 = vmax.xlane.f32.xlu0 %v604
  %v606 = vpop.xlane.xlu0 %605
  %v607 = vsel %vm203, %v601, -inf
  %608 = vmax.xlane.f32.xlu0 %v607
  %v609 = vpop.xlane.xlu0 %608
  %v610 = vsub.f32 %v596, %v606
  %v611 = vsub.f32 %v601, %v609
  %v612 = vmul.f32 %v610, 1.442695
  %v613 = vpow.pop %v612
  %v614 = vmul.f32 %v611, 1.442695
  %v615 = vpow.pop %v614
  %v616 = vsel %vm203, %v613, 0.0
  %617 = vadd.xlane.f32.xlu0 %v616
  %v618 = vpop.xlane.xlu0 %617
  %v619 = vsel %vm203, %v615, 0.0
  %620 = vadd.xlane.f32.xlu0 %v619
  %v621 = vpop.xlane.xlu0 %620
  %v622 = vrcp.pop %v618
  %v623 = vrcp.pop %v621
  %624 = vrot.lane.b32.xlu0 %v103, 48
  %v625 = vpop.permute.xlu0 %624
  %626 = vrot.lane.b32.xlu0 %v108, 48
  %v627 = vpop.permute.xlu0 %626
  %v631 = vsel %vm203, %v613, 0
  %v634 = vsel %vm203, %v615, 0
  %636 = vmatprep.subr.mxu0 0.0
  %637 = vmatpush1.msra.mxu0 0.0
  %638 = vmatprep.subr.mxu0 0.0
  %639 = vmatpush1.msra.mxu0 0.0
  %640 = vmatprep.subr.mxu0 0.0
  %641 = vmatpush1.msra.mxu0 0.0
  %642 = vmatprep.subr.mxu0 0.0
  %643 = vmatpush1.msra.mxu0 0.0
  %644 = vmatprep.subr.mxu0 0.0
  %645 = vmatpush1.msra.mxu0 0.0
  %646 = vmatprep.subr.mxu0 0.0
  %647 = vmatpush1.msra.mxu0 0.0
  %648 = vmatprep.subr.mxu0 0.0
  %649 = vmatpush1.msra.mxu0 0.0
  %650 = vmatprep.subr.mxu0 0.0
  %651 = vmatpush1.msra.mxu0 0.0
  %652 = vmatprep.subr.mxu0 0.0
  %653 = vmatpush1.msra.mxu0 0.0
  %654 = vmatprep.subr.mxu0 0.0
  %655 = vmatpush1.msra.mxu0 0.0
  %656 = vmatprep.subr.mxu0 0.0
  %657 = vmatpush1.msra.mxu0 0.0
  %658 = vmatprep.subr.mxu0 0.0
  %659 = vmatpush1.msra.mxu0 0.0
  %660 = vmatprep.subr.mxu0 0.0
  %661 = vmatpush1.msra.mxu0 0.0
  %662 = vmatprep.subr.mxu0 0.0
  %663 = vmatpush1.msra.mxu0 0.0
  %664 = vmatprep.subr.mxu0 0.0
  %665 = vmatpush1.msra.mxu0 %v627
  %666 = vmatprep.subr.mxu0 0.0
  %667 = vmatpush1.msra.mxu0 %v625
  %668 = vmatprep.subr.mxu0 0.0
  %669 = vmatpush2.msra.mxu0 0.0
  %670 = vmatprep.subr.mxu0 0.0
  %671 = vmatpush2.msra.mxu0 0.0
  %672 = vmatprep.subr.mxu0 0.0
  %673 = vmatpush2.msra.mxu0 0.0
  %674 = vmatprep.subr.mxu0 0.0
  %675 = vmatpush2.msra.mxu0 0.0
  %676 = vmatprep.subr.mxu0 0.0
  %677 = vmatpush2.msra.mxu0 0.0
  %678 = vmatprep.subr.mxu0 0.0
  %679 = vmatpush2.msra.mxu0 0.0
  %680 = vmatprep.subr.mxu0 0.0
  %681 = vmatpush2.msra.mxu0 0.0
  %682 = vmatprep.subr.mxu0 0.0
  %683 = vmatpush2.msra.mxu0 0.0
  %684 = vmatprep.subr.mxu0 0.0
  %685 = vmatpush2.msra.mxu0 0.0
  %686 = vmatprep.subr.mxu0 0.0
  %687 = vmatpush2.msra.mxu0 0.0
  %688 = vmatprep.subr.mxu0 0.0
  %689 = vmatpush2.msra.mxu0 0.0
  %690 = vmatprep.subr.mxu0 0.0
  %691 = vmatpush2.msra.mxu0 0.0
  %692 = vmatprep.subr.mxu0 0.0
  %693 = vmatpush2.msra.mxu0 0.0
  %694 = vmatprep.subr.mxu0 0.0
  %695 = vmatpush2.msra.mxu0 0.0
  %696 = vmatprep.subr.mxu0 0.0
  %697 = vmatpush2.msra.mxu0 0.0
  %698 = vmatprep.subr.mxu0 0.0
  %699 = vmatpush2.msra.mxu0 0.0
  %700 = vmatprep.mubr.f32.mxu0 0.0
  %701 = vmatmul.mubr.f32.gmra.mxu0 %v631
  %v702 = vpop.f32.mrf.mxu0
  %v703 = vadd.f32 0.0, %v702
  %v704 = vpop.f32.mrf.mxu0
  %705 = vmatprep.mubr.f32.mxu0 0.0
  %706 = vmatmul.mubr.f32.gmra.mxu0 %v634
  %v707 = vpop.f32.mrf.mxu0
  %v708 = vadd.f32 0.0, %v707
  %v709 = vpop.f32.mrf.mxu0
  %710 = vdwg.mxu0
  %v711 = vmul.f32 %v703, %v622
  %v712 = vmul.f32 %v708, %v623
  %713 = vrot.lane.b32.xlu0 %v103, 104
  %v714 = vpop.permute.xlu0 %713
  %715 = vrot.lane.b32.xlu0 %v108, 104
  %v716 = vpop.permute.xlu0 %715
  %717 = vrot.lane.b32.xlu0 %v103, 72
  %v718 = vpop.permute.xlu0 %717
  %719 = vrot.lane.b32.xlu0 %v108, 72
  %v720 = vpop.permute.xlu0 %719
  %v721 = vsel %vm119, %v714, 0
  %v723 = vsel %vm119, %v716, 0
  %v725 = vsel %vm119, %v718, 0
  %v727 = vsel %vm119, %v720, 0
  %729 = vmatprep.subr.mxu0 0.0
  %730 = vmatpush1.xpose.msra.mxu0 0.0
  %731 = vmatprep.subr.mxu0 0.0
  %732 = vmatpush1.xpose.msra.mxu0 0.0
  %733 = vmatprep.subr.mxu0 0.0
  %734 = vmatpush1.xpose.msra.mxu0 0.0
  %735 = vmatprep.subr.mxu0 0.0
  %736 = vmatpush1.xpose.msra.mxu0 0.0
  %737 = vmatprep.subr.mxu0 0.0
  %738 = vmatpush1.xpose.msra.mxu0 0.0
  %739 = vmatprep.subr.mxu0 0.0
  %740 = vmatpush1.xpose.msra.mxu0 0.0
  %741 = vmatprep.subr.mxu0 0.0
  %742 = vmatpush1.xpose.msra.mxu0 0.0
  %743 = vmatprep.subr.mxu0 0.0
  %744 = vmatpush1.xpose.msra.mxu0 0.0
  %745 = vmatprep.subr.mxu0 0.0
  %746 = vmatpush1.xpose.msra.mxu0 0.0
  %747 = vmatprep.subr.mxu0 0.0
  %748 = vmatpush1.xpose.msra.mxu0 0.0
  %749 = vmatprep.subr.mxu0 0.0
  %750 = vmatpush1.xpose.msra.mxu0 0.0
  %751 = vmatprep.subr.mxu0 0.0
  %752 = vmatpush1.xpose.msra.mxu0 0.0
  %753 = vmatprep.subr.mxu0 0.0
  %754 = vmatpush1.xpose.msra.mxu0 0.0
  %755 = vmatprep.subr.mxu0 0.0
  %756 = vmatpush1.xpose.msra.mxu0 0.0
  %757 = vmatprep.subr.mxu0 0.0
  %758 = vmatpush1.xpose.msra.mxu0 %v727
  %759 = vmatprep.subr.mxu0 0.0
  %760 = vmatpush1.xpose.msra.mxu0 %v725
  %761 = vmatprep.subr.mxu0 0.0
  %762 = vmatpush2.xpose.msra.mxu0 0.0
  %763 = vmatprep.subr.mxu0 0.0
  %764 = vmatpush2.xpose.msra.mxu0 0.0
  %765 = vmatprep.subr.mxu0 0.0
  %766 = vmatpush2.xpose.msra.mxu0 0.0
  %767 = vmatprep.subr.mxu0 0.0
  %768 = vmatpush2.xpose.msra.mxu0 0.0
  %769 = vmatprep.subr.mxu0 0.0
  %770 = vmatpush2.xpose.msra.mxu0 0.0
  %771 = vmatprep.subr.mxu0 0.0
  %772 = vmatpush2.xpose.msra.mxu0 0.0
  %773 = vmatprep.subr.mxu0 0.0
  %774 = vmatpush2.xpose.msra.mxu0 0.0
  %775 = vmatprep.subr.mxu0 0.0
  %776 = vmatpush2.xpose.msra.mxu0 0.0
  %777 = vmatprep.subr.mxu0 0.0
  %778 = vmatpush2.xpose.msra.mxu0 0.0
  %779 = vmatprep.subr.mxu0 0.0
  %780 = vmatpush2.xpose.msra.mxu0 0.0
  %781 = vmatprep.subr.mxu0 0.0
  %782 = vmatpush2.xpose.msra.mxu0 0.0
  %783 = vmatprep.subr.mxu0 0.0
  %784 = vmatpush2.xpose.msra.mxu0 0.0
  %785 = vmatprep.subr.mxu0 0.0
  %786 = vmatpush2.xpose.msra.mxu0 0.0
  %787 = vmatprep.subr.mxu0 0.0
  %788 = vmatpush2.xpose.msra.mxu0 0.0
  %789 = vmatprep.subr.mxu0 0.0
  %790 = vmatpush2.xpose.msra.mxu0 0.0
  %791 = vmatprep.subr.mxu0 0.0
  %792 = vmatpush2.xpose.msra.mxu0 0.0
  %793 = vmatprep.mubr.f32.mxu0 0.0
  %794 = vmatmul.mubr.f32.gmra.mxu0 %v721
  %v795 = vpop.f32.mrf.mxu0
  %v796 = vadd.f32 %v111, %v795
  %v797 = vpop.f32.mrf.mxu0
  %798 = vmatprep.mubr.f32.mxu0 0.0
  %799 = vmatmul.mubr.f32.gmra.mxu0 %v723
  %v800 = vpop.f32.mrf.mxu0
  %v801 = vadd.f32 %v112, %v800
  %v802 = vpop.f32.mrf.mxu0
  %803 = vdwg.mxu0
  %v804 = vsel %vm203, %v796, -inf
  %805 = vmax.xlane.f32.xlu0 %v804
  %v806 = vpop.xlane.xlu0 %805
  %v807 = vsel %vm203, %v801, -inf
  %808 = vmax.xlane.f32.xlu0 %v807
  %v809 = vpop.xlane.xlu0 %808
  %v810 = vsub.f32 %v796, %v806
  %v811 = vsub.f32 %v801, %v809
  %v812 = vmul.f32 %v810, 1.442695
  %v813 = vpow.pop %v812
  %v814 = vmul.f32 %v811, 1.442695
  %v815 = vpow.pop %v814
  %v816 = vsel %vm203, %v813, 0.0
  %817 = vadd.xlane.f32.xlu0 %v816
  %v818 = vpop.xlane.xlu0 %817
  %v819 = vsel %vm203, %v815, 0.0
  %820 = vadd.xlane.f32.xlu0 %v819
  %v821 = vpop.xlane.xlu0 %820
  %v822 = vrcp.pop %v818
  %v823 = vrcp.pop %v821
  %824 = vrot.lane.b32.xlu0 %v103, 40
  %v825 = vpop.permute.xlu0 %824
  %826 = vrot.lane.b32.xlu0 %v108, 40
  %v827 = vpop.permute.xlu0 %826
  %v831 = vsel %vm203, %v813, 0
  %v834 = vsel %vm203, %v815, 0
  %836 = vmatprep.subr.mxu0 0.0
  %837 = vmatpush1.msra.mxu0 0.0
  %838 = vmatprep.subr.mxu0 0.0
  %839 = vmatpush1.msra.mxu0 0.0
  %840 = vmatprep.subr.mxu0 0.0
  %841 = vmatpush1.msra.mxu0 0.0
  %842 = vmatprep.subr.mxu0 0.0
  %843 = vmatpush1.msra.mxu0 0.0
  %844 = vmatprep.subr.mxu0 0.0
  %845 = vmatpush1.msra.mxu0 0.0
  %846 = vmatprep.subr.mxu0 0.0
  %847 = vmatpush1.msra.mxu0 0.0
  %848 = vmatprep.subr.mxu0 0.0
  %849 = vmatpush1.msra.mxu0 0.0
  %850 = vmatprep.subr.mxu0 0.0
  %851 = vmatpush1.msra.mxu0 0.0
  %852 = vmatprep.subr.mxu0 0.0
  %853 = vmatpush1.msra.mxu0 0.0
  %854 = vmatprep.subr.mxu0 0.0
  %855 = vmatpush1.msra.mxu0 0.0
  %856 = vmatprep.subr.mxu0 0.0
  %857 = vmatpush1.msra.mxu0 0.0
  %858 = vmatprep.subr.mxu0 0.0
  %859 = vmatpush1.msra.mxu0 0.0
  %860 = vmatprep.subr.mxu0 0.0
  %861 = vmatpush1.msra.mxu0 0.0
  %862 = vmatprep.subr.mxu0 0.0
  %863 = vmatpush1.msra.mxu0 0.0
  %864 = vmatprep.subr.mxu0 0.0
  %865 = vmatpush1.msra.mxu0 %v827
  %866 = vmatprep.subr.mxu0 0.0
  %867 = vmatpush1.msra.mxu0 %v825
  %868 = vmatprep.subr.mxu0 0.0
  %869 = vmatpush2.msra.mxu0 0.0
  %870 = vmatprep.subr.mxu0 0.0
  %871 = vmatpush2.msra.mxu0 0.0
  %872 = vmatprep.subr.mxu0 0.0
  %873 = vmatpush2.msra.mxu0 0.0
  %874 = vmatprep.subr.mxu0 0.0
  %875 = vmatpush2.msra.mxu0 0.0
  %876 = vmatprep.subr.mxu0 0.0
  %877 = vmatpush2.msra.mxu0 0.0
  %878 = vmatprep.subr.mxu0 0.0
  %879 = vmatpush2.msra.mxu0 0.0
  %880 = vmatprep.subr.mxu0 0.0
  %881 = vmatpush2.msra.mxu0 0.0
  %882 = vmatprep.subr.mxu0 0.0
  %883 = vmatpush2.msra.mxu0 0.0
  %884 = vmatprep.subr.mxu0 0.0
  %885 = vmatpush2.msra.mxu0 0.0
  %886 = vmatprep.subr.mxu0 0.0
  %887 = vmatpush2.msra.mxu0 0.0
  %888 = vmatprep.subr.mxu0 0.0
  %889 = vmatpush2.msra.mxu0 0.0
  %890 = vmatprep.subr.mxu0 0.0
  %891 = vmatpush2.msra.mxu0 0.0
  %892 = vmatprep.subr.mxu0 0.0
  %893 = vmatpush2.msra.mxu0 0.0
  %894 = vmatprep.subr.mxu0 0.0
  %895 = vmatpush2.msra.mxu0 0.0
  %896 = vmatprep.subr.mxu0 0.0
  %897 = vmatpush2.msra.mxu0 0.0
  %898 = vmatprep.subr.mxu0 0.0
  %899 = vmatpush2.msra.mxu0 0.0
  %900 = vmatprep.mubr.f32.mxu0 0.0
  %901 = vmatmul.mubr.f32.gmra.mxu0 %v831
  %v902 = vpop.f32.mrf.mxu0
  %v903 = vadd.f32 0.0, %v902
  %v904 = vpop.f32.mrf.mxu0
  %905 = vmatprep.mubr.f32.mxu0 0.0
  %906 = vmatmul.mubr.f32.gmra.mxu0 %v834
  %v907 = vpop.f32.mrf.mxu0
  %v908 = vadd.f32 0.0, %v907
  %v909 = vpop.f32.mrf.mxu0
  %910 = vdwg.mxu0
  %v911 = vmul.f32 %v903, %v822
  %v912 = vmul.f32 %v908, %v823
  %915 = vrot.lane.b32.xlu0 %v511, 8
  %v916 = vpop.permute.xlu0 %915
  %917 = vrot.lane.b32.xlu0 %v512, 8
  %v918 = vpop.permute.xlu0 %917
  %923 = vrot.lane.b32.xlu0 %v711, 16
  %v924 = vpop.permute.xlu0 %923
  %925 = vrot.lane.b32.xlu0 %v712, 16
  %v926 = vpop.permute.xlu0 %925
  %931 = vrot.lane.b32.xlu0 %v911, 24
  %v932 = vpop.permute.xlu0 %931
  %933 = vrot.lane.b32.xlu0 %v912, 24
  %v934 = vpop.permute.xlu0 %933
  %v937 = vsel %vm119, %v311, %v916
  %v938 = vsel %vm119, %v312, %v918
  %v939 = vsel %vm203, %v937, %v924
  %v940 = vsel %vm203, %v938, %v926
  %vm941 = vcmask 195584
  %v942 = vsel %vm941, %v939, %v932
  %v943 = vsel %vm941, %v940, %v934
  %v944 = vld [vmem:[%s1] sm:$0xff]
  %v945 = vld [vmem:[%s1 + $0x8] sm:$0xff]
  %v946 = vld [vmem:[%s1 + $0x10] sm:$0xff]
  %v947 = vld [vmem:[%s1 + $0x18] sm:$0xff]
  %952 = vrot.lane.b32.xlu0 %v944, 32
  %v953 = vpop.permute.xlu0 %952
  %954 = vrot.lane.b32.xlu0 %v945, 32
  %v955 = vpop.permute.xlu0 %954
  %956 = vrot.lane.b32.xlu0 %v946, 32
  %v957 = vpop.permute.xlu0 %956
  %958 = vrot.lane.b32.xlu0 %v947, 32
  %v959 = vpop.permute.xlu0 %958
  %965 = vrot.lane.b32.xlu0 %v28, 32
  %v966 = vpop.permute.xlu0 %965
  %vm968 = vcmask 261120
  %v970 = vsel %vm968, %v942, 0
  %v973 = vsel %vm968, %v943, 0
  %975 = vmatprep.subr.mxu0 0.0
  %976 = vmatpush1.msra.mxu0 0.0
  %977 = vmatprep.subr.mxu0 0.0
  %978 = vmatpush1.msra.mxu0 0.0
  %979 = vmatprep.subr.mxu0 0.0
  %980 = vmatpush1.msra.mxu0 0.0
  %981 = vmatprep.subr.mxu0 0.0
  %982 = vmatpush1.msra.mxu0 0.0
  %983 = vmatprep.subr.mxu0 0.0
  %984 = vmatpush1.msra.mxu0 0.0
  %985 = vmatprep.subr.mxu0 0.0
  %986 = vmatpush1.msra.mxu0 0.0
  %987 = vmatprep.subr.mxu0 0.0
  %988 = vmatpush1.msra.mxu0 0.0
  %989 = vmatprep.subr.mxu0 0.0
  %990 = vmatpush1.msra.mxu0 0.0
  %991 = vmatprep.subr.mxu0 0.0
  %992 = vmatpush1.msra.mxu0 0.0
  %993 = vmatprep.subr.mxu0 0.0
  %994 = vmatpush1.msra.mxu0 0.0
  %995 = vmatprep.subr.mxu0 0.0
  %996 = vmatpush1.msra.mxu0 0.0
  %997 = vmatprep.subr.mxu0 0.0
  %998 = vmatpush1.msra.mxu0 0.0
  %999 = vmatprep.subr.mxu0 0.0
  %1000 = vmatpush1.msra.mxu0 %v959
  %1001 = vmatprep.subr.mxu0 0.0
  %1002 = vmatpush1.msra.mxu0 %v957
  %1003 = vmatprep.subr.mxu0 0.0
  %1004 = vmatpush1.msra.mxu0 %v955
  %1005 = vmatprep.subr.mxu0 0.0
  %1006 = vmatpush1.msra.mxu0 %v953
  %1007 = vmatprep.subr.mxu0 0.0
  %1008 = vmatpush2.msra.mxu0 0.0
  %1009 = vmatprep.subr.mxu0 0.0
  %1010 = vmatpush2.msra.mxu0 0.0
  %1011 = vmatprep.subr.mxu0 0.0
  %1012 = vmatpush2.msra.mxu0 0.0
  %1013 = vmatprep.subr.mxu0 0.0
  %1014 = vmatpush2.msra.mxu0 0.0
  %1015 = vmatprep.subr.mxu0 0.0
  %1016 = vmatpush2.msra.mxu0 0.0
  %1017 = vmatprep.subr.mxu0 0.0
  %1018 = vmatpush2.msra.mxu0 0.0
  %1019 = vmatprep.subr.mxu0 0.0
  %1020 = vmatpush2.msra.mxu0 0.0
  %1021 = vmatprep.subr.mxu0 0.0
  %1022 = vmatpush2.msra.mxu0 0.0
  %1023 = vmatprep.subr.mxu0 0.0
  %1024 = vmatpush2.msra.mxu0 0.0
  %1025 = vmatprep.subr.mxu0 0.0
  %1026 = vmatpush2.msra.mxu0 0.0
  %1027 = vmatprep.subr.mxu0 0.0
  %1028 = vmatpush2.msra.mxu0 0.0
  %1029 = vmatprep.subr.mxu0 0.0
  %1030 = vmatpush2.msra.mxu0 0.0
  %1031 = vmatprep.subr.mxu0 0.0
  %1032 = vmatpush2.msra.mxu0 0.0
  %1033 = vmatprep.subr.mxu0 0.0
  %1034 = vmatpush2.msra.mxu0 0.0
  %1035 = vmatprep.subr.mxu0 0.0
  %1036 = vmatpush2.msra.mxu0 0.0
  %1037 = vmatprep.subr.mxu0 0.0
  %1038 = vmatpush2.msra.mxu0 0.0
  %1039 = vmatprep.mubr.f32.mxu0 0.0
  %1040 = vmatmul.mubr.f32.gmra.mxu0 %v970
  %v1041 = vpop.f32.mrf.mxu0
  %v1042 = vadd.f32 %v966, %v1041
  %v1043 = vpop.f32.mrf.mxu0
  %1044 = vmatprep.mubr.f32.mxu0 0.0
  %1045 = vmatmul.mubr.f32.gmra.mxu0 %v973
  %v1046 = vpop.f32.mrf.mxu0
  %v1047 = vadd.f32 %v966, %v1046
  %v1048 = vpop.f32.mrf.mxu0
  %1049 = vdwg.mxu0
  %v1050 = vld [vmem:[%s1 + $0x61] sm:$0x1]
  %v1051 = vld [vmem:[%s1 + $0x62] sm:$0x1]
  %v1052 = vld [vmem:[%s1 + $0x63] sm:$0x1]
  %1053 = vrot.lane.b32.xlu0 %v14, 96
  %v1054 = vpop.permute.xlu0 %1053
  %1055 = vrot.lane.b32.xlu0 %v15, 96
  %v1056 = vpop.permute.xlu0 %1055
  %v1059 = vadd.f32 %v1042, %v1054
  %v1060 = vadd.f32 %v1047, %v1056
  %v1061 = vsel %vm968, %v1059, 0.0
  %1062 = vadd.xlane.f32.xlu0 %v1061
  %v1063 = vpop.xlane.xlu0 %1062
  %v1064 = vsel %vm968, %v1060, 0.0
  %1065 = vadd.xlane.f32.xlu0 %v1064
  %v1066 = vpop.xlane.xlu0 %1065
  %v1067 = vrcp.pop 32.0
  %v1068 = vmul.f32 %v1063, %v1067
  %v1069 = vmul.f32 %v1066, %v1067
  %v1070 = vsub.f32 %v1059, %v1068
  %v1071 = vsub.f32 %v1060, %v1069
  %v1072 = vmul.f32 %v1070, %v1070
  %v1073 = vmul.f32 %v1071, %v1071
  %v1074 = vsel %vm968, %v1072, 0.0
  %1075 = vadd.xlane.f32.xlu0 %v1074
  %v1076 = vpop.xlane.xlu0 %1075
  %v1077 = vsel %vm968, %v1073, 0.0
  %1078 = vadd.xlane.f32.xlu0 %v1077
  %v1079 = vpop.xlane.xlu0 %1078
  %v1080 = vmul.f32 %v1076, %v1067
  %v1081 = vmul.f32 %v1079, %v1067
  %v1082 = vadd.f32 %v1080, 1e-05
  %v1083 = vadd.f32 %v1081, 1e-05
  %v1084 = vrsqrt.pop %v1082
  %v1085 = vrsqrt.pop %v1083
  %v1086 = vmul.f32 %v1070, %v1084
  %v1087 = vmul.f32 %v1071, %v1085
  %v1088 = vlaneseq
  %v1089 = vshrl.u32 %v1088, 7
  %v1090 = vsub.s32 0, %v1089
  %v1091 = vrot.slane %v1050, %v1090
  %v1092 = vmul.f32 %v1086, %v1091
  %v1093 = vmul.f32 %v1087, %v1091
  %1095 = vrot.lane.b32.xlu0 %v1091, 96
  %v1096 = vpop.permute.xlu0 %1095
  %v1098 = vadd.f32 %v1092, %v1096
  %v1099 = vadd.f32 %v1093, %v1096
  %v1100 = vld [vmem:[%s1 + $0x40] sm:$0xff]
  %v1101 = vld [vmem:[%s1 + $0x48] sm:$0xff]
  %v1102 = vld [vmem:[%s1 + $0x50] sm:$0xff]
  %v1103 = vld [vmem:[%s1 + $0x58] sm:$0xff]
  %v1104 = vlaneseq
  %v1105 = vshrl.u32 %v1104, 7
  %v1106 = vsub.s32 0, %v1105
  %v1107 = vrot.slane %v1052, %v1106
  %v1109 = vsel %vm968, %v1098, 0
  %v1112 = vsel %vm968, %v1099, 0
  %1114 = vmatprep.subr.mxu0 0.0
  %1115 = vmatpush1.msra.mxu0 0.0
  %1116 = vmatprep.subr.mxu0 0.0
  %1117 = vmatpush1.msra.mxu0 0.0
  %1118 = vmatprep.subr.mxu0 0.0
  %1119 = vmatpush1.msra.mxu0 0.0
  %1120 = vmatprep.subr.mxu0 0.0
  %1121 = vmatpush1.msra.mxu0 0.0
  %1122 = vmatprep.subr.mxu0 0.0
  %1123 = vmatpush1.msra.mxu0 0.0
  %1124 = vmatprep.subr.mxu0 0.0
  %1125 = vmatpush1.msra.mxu0 0.0
  %1126 = vmatprep.subr.mxu0 0.0
  %1127 = vmatpush1.msra.mxu0 0.0
  %1128 = vmatprep.subr.mxu0 0.0
  %1129 = vmatpush1.msra.mxu0 0.0
  %1130 = vmatprep.subr.mxu0 0.0
  %1131 = vmatpush1.msra.mxu0 0.0
  %1132 = vmatprep.subr.mxu0 0.0
  %1133 = vmatpush1.msra.mxu0 0.0
  %1134 = vmatprep.subr.mxu0 0.0
  %1135 = vmatpush1.msra.mxu0 0.0
  %1136 = vmatprep.subr.mxu0 0.0
  %1137 = vmatpush1.msra.mxu0 0.0
  %1138 = vmatprep.subr.mxu0 0.0
  %1139 = vmatpush1.msra.mxu0 %v1103
  %1140 = vmatprep.subr.mxu0 0.0
  %1141 = vmatpush1.msra.mxu0 %v1102
  %1142 = vmatprep.subr.mxu0 0.0
  %1143 = vmatpush1.msra.mxu0 %v1101
  %1144 = vmatprep.subr.mxu0 0.0
  %1145 = vmatpush1.msra.mxu0 %v1100
  %1146 = vmatprep.subr.mxu0 0.0
  %1147 = vmatpush2.msra.mxu0 0.0
  %1148 = vmatprep.subr.mxu0 0.0
  %1149 = vmatpush2.msra.mxu0 0.0
  %1150 = vmatprep.subr.mxu0 0.0
  %1151 = vmatpush2.msra.mxu0 0.0
  %1152 = vmatprep.subr.mxu0 0.0
  %1153 = vmatpush2.msra.mxu0 0.0
  %1154 = vmatprep.subr.mxu0 0.0
  %1155 = vmatpush2.msra.mxu0 0.0
  %1156 = vmatprep.subr.mxu0 0.0
  %1157 = vmatpush2.msra.mxu0 0.0
  %1158 = vmatprep.subr.mxu0 0.0
  %1159 = vmatpush2.msra.mxu0 0.0
  %1160 = vmatprep.subr.mxu0 0.0
  %1161 = vmatpush2.msra.mxu0 0.0
  %1162 = vmatprep.subr.mxu0 0.0
  %1163 = vmatpush2.msra.mxu0 0.0
  %1164 = vmatprep.subr.mxu0 0.0
  %1165 = vmatpush2.msra.mxu0 0.0
  %1166 = vmatprep.subr.mxu0 0.0
  %1167 = vmatpush2.msra.mxu0 0.0
  %1168 = vmatprep.subr.mxu0 0.0
  %1169 = vmatpush2.msra.mxu0 0.0
  %1170 = vmatprep.subr.mxu0 0.0
  %1171 = vmatpush2.msra.mxu0 0.0
  %1172 = vmatprep.subr.mxu0 0.0
  %1173 = vmatpush2.msra.mxu0 0.0
  %1174 = vmatprep.subr.mxu0 0.0
  %1175 = vmatpush2.msra.mxu0 0.0
  %1176 = vmatprep.subr.mxu0 0.0
  %1177 = vmatpush2.msra.mxu0 0.0
  %1178 = vmatprep.mubr.f32.mxu0 0.0
  %1179 = vmatmul.mubr.f32.gmra.mxu0 %v1109
  %v1180 = vpop.f32.mrf.mxu0
  %v1181 = vadd.f32 %v1107, %v1180
  %v1182 = vpop.f32.mrf.mxu0
  %1183 = vmatprep.mubr.f32.mxu0 0.0
  %1184 = vmatmul.mubr.f32.gmra.mxu0 %v1112
  %v1185 = vpop.f32.mrf.mxu0
  %v1186 = vadd.f32 %v1107, %v1185
  %v1187 = vpop.f32.mrf.mxu0
  %1188 = vdwg.mxu0
  %v1189 = vmax.f32 %v1181, 0.0
  %v1190 = vmax.f32 %v1186, 0.0
  %v1191 = vld [vmem:[%s2] sm:$0xff]
  %v1192 = vld [vmem:[%s2 + $0x8] sm:$0xff]
  %v1193 = vld [vmem:[%s2 + $0x10] sm:$0xff]
  %v1194 = vld [vmem:[%s2 + $0x18] sm:$0xff]
  %v1195 = vld [vmem:[%s2 + $0x20] sm:$0xff]
  %v1196 = vld [vmem:[%s2 + $0x28] sm:$0xff]
  %v1197 = vld [vmem:[%s2 + $0x30] sm:$0xff]
  %v1198 = vld [vmem:[%s2 + $0x38] sm:$0xff]
  %v1199 = vld [vmem:[%s2 + $0x40] sm:$0xff]
  %v1200 = vld [vmem:[%s2 + $0x48] sm:$0xff]
  %v1201 = vld [vmem:[%s2 + $0x50] sm:$0xff]
  %v1202 = vld [vmem:[%s2 + $0x58] sm:$0xff]
  %v1203 = vld [vmem:[%s2 + $0x60] sm:$0xff]
  %v1204 = vld [vmem:[%s2 + $0x68] sm:$0xff]
  %v1205 = vld [vmem:[%s2 + $0x70] sm:$0xff]
  %v1206 = vld [vmem:[%s2 + $0x78] sm:$0xff]
  %v1207 = vlaneseq
  %v1208 = vshrl.u32 %v1207, 7
  %v1209 = vsub.s32 0, %v1208
  %v1210 = vrot.slane %v1051, %v1209
  %1211 = vmatprep.subr.mxu0 0.0
  %1212 = vmatpush1.msra.mxu0 %v1206
  %1213 = vmatprep.subr.mxu0 0.0
  %1214 = vmatpush1.msra.mxu0 %v1205
  %1215 = vmatprep.subr.mxu0 0.0
  %1216 = vmatpush1.msra.mxu0 %v1204
  %1217 = vmatprep.subr.mxu0 0.0
  %1218 = vmatpush1.msra.mxu0 %v1203
  %1219 = vmatprep.subr.mxu0 0.0
  %1220 = vmatpush1.msra.mxu0 %v1202
  %1221 = vmatprep.subr.mxu0 0.0
  %1222 = vmatpush1.msra.mxu0 %v1201
  %1223 = vmatprep.subr.mxu0 0.0
  %1224 = vmatpush1.msra.mxu0 %v1200
  %1225 = vmatprep.subr.mxu0 0.0
  %1226 = vmatpush1.msra.mxu0 %v1199
  %1227 = vmatprep.subr.mxu0 0.0
  %1228 = vmatpush1.msra.mxu0 %v1198
  %1229 = vmatprep.subr.mxu0 0.0
  %1230 = vmatpush1.msra.mxu0 %v1197
  %1231 = vmatprep.subr.mxu0 0.0
  %1232 = vmatpush1.msra.mxu0 %v1196
  %1233 = vmatprep.subr.mxu0 0.0
  %1234 = vmatpush1.msra.mxu0 %v1195
  %1235 = vmatprep.subr.mxu0 0.0
  %1236 = vmatpush1.msra.mxu0 %v1194
  %1237 = vmatprep.subr.mxu0 0.0
  %1238 = vmatpush1.msra.mxu0 %v1193
  %1239 = vmatprep.subr.mxu0 0.0
  %1240 = vmatpush1.msra.mxu0 %v1192
  %1241 = vmatprep.subr.mxu0 0.0
  %1242 = vmatpush1.msra.mxu0 %v1191
  %1243 = vmatprep.subr.mxu0 0.0
  %1244 = vmatpush2.msra.mxu0 0.0
  %1245 = vmatprep.subr.mxu0 0.0
  %1246 = vmatpush2.msra.mxu0 0.0
  %1247 = vmatprep.subr.mxu0 0.0
  %1248 = vmatpush2.msra.mxu0 0.0
  %1249 = vmatprep.subr.mxu0 0.0
  %1250 = vmatpush2.msra.mxu0 0.0
  %1251 = vmatprep.subr.mxu0 0.0
  %1252 = vmatpush2.msra.mxu0 0.0
  %1253 = vmatprep.subr.mxu0 0.0
  %1254 = vmatpush2.msra.mxu0 0.0
  %1255 = vmatprep.subr.mxu0 0.0
  %1256 = vmatpush2.msra.mxu0 0.0
  %1257 = vmatprep.subr.mxu0 0.0
  %1258 = vmatpush2.msra.mxu0 0.0
  %1259 = vmatprep.subr.mxu0 0.0
  %1260 = vmatpush2.msra.mxu0 0.0
  %1261 = vmatprep.subr.mxu0 0.0
  %1262 = vmatpush2.msra.mxu0 0.0
  %1263 = vmatprep.subr.mxu0 0.0
  %1264 = vmatpush2.msra.mxu0 0.0
  %1265 = vmatprep.subr.mxu0 0.0
  %1266 = vmatpush2.msra.mxu0 0.0
  %1267 = vmatprep.subr.mxu0 0.0
  %1268 = vmatpush2.msra.mxu0 0.0
  %1269 = vmatprep.subr.mxu0 0.0
  %1270 = vmatpush2.msra.mxu0 0.0
  %1271 = vmatprep.subr.mxu0 0.0
  %1272 = vmatpush2.msra.mxu0 0.0
  %1273 = vmatprep.subr.mxu0 0.0
  %1274 = vmatpush2.msra.mxu0 0.0
  %1275 = vmatprep.mubr.f32.mxu0 0.0
  %1276 = vmatmul.mubr.f32.gmra.mxu0 %v1189
  %v1277 = vpop.f32.mrf.mxu0
  %v1278 = vadd.f32 %v1210, %v1277
  %v1279 = vpop.f32.mrf.mxu0
  %1280 = vmatprep.mubr.f32.mxu0 0.0
  %1281 = vmatmul.mubr.f32.gmra.mxu0 %v1190
  %v1282 = vpop.f32.mrf.mxu0
  %v1283 = vadd.f32 %v1210, %v1282
  %v1284 = vpop.f32.mrf.mxu0
  %1285 = vdwg.mxu0
  %v1286 = vadd.f32 %v1278, %v1098
  %v1287 = vadd.f32 %v1283, %v1099
  %v1288 = vsel %vm968, %v1286, 0.0
  %1289 = vadd.xlane.f32.xlu0 %v1288
  %v1290 = vpop.xlane.xlu0 %1289
  %v1291 = vsel %vm968, %v1287, 0.0
  %1292 = vadd.xlane.f32.xlu0 %v1291
  %v1293 = vpop.xlane.xlu0 %1292
  %v1294 = vmul.f32 %v1290, %v1067
  %v1295 = vmul.f32 %v1293, %v1067
  %v1296 = vsub.f32 %v1286, %v1294
  %v1297 = vsub.f32 %v1287, %v1295
  %v1298 = vmul.f32 %v1296, %v1296
  %v1299 = vmul.f32 %v1297, %v1297
  %v1300 = vsel %vm968, %v1298, 0.0
  %1301 = vadd.xlane.f32.xlu0 %v1300
  %v1302 = vpop.xlane.xlu0 %1301
  %v1303 = vsel %vm968, %v1299, 0.0
  %1304 = vadd.xlane.f32.xlu0 %v1303
  %v1305 = vpop.xlane.xlu0 %1304
  %v1306 = vmul.f32 %v1302, %v1067
  %v1307 = vmul.f32 %v1305, %v1067
  %v1308 = vadd.f32 %v1306, 1e-05
  %v1309 = vadd.f32 %v1307, 1e-05
  %v1310 = vrsqrt.pop %v1308
  %v1311 = vrsqrt.pop %v1309
  %v1312 = vmul.f32 %v1296, %v1310
  %v1313 = vmul.f32 %v1297, %v1311
  %1314 = vrot.lane.b32.xlu0 %v1091, 64
  %v1315 = vpop.permute.xlu0 %1314
  %v1317 = vmul.f32 %v1312, %v1315
  %v1318 = vmul.f32 %v1313, %v1315
  %1319 = vrot.lane.b32.xlu0 %v1091, 32
  %v1320 = vpop.permute.xlu0 %1319
  %v1322 = vadd.f32 %v1317, %v1320
  %v1323 = vadd.f32 %v1318, %v1320
  %1324 = vst.msk [vmem:[%s3] sm:$0xff] %vm968, %v1322
  %1325 = vst.msk [vmem:[%s3 + $0x8] sm:$0xff] %vm968, %v1323
  // Predicated region
  $region14: #{decoder_forward.1} parent=0 // pred_check
    _
  $region15: #{decoder_forward.1} parent=0 // pred_check_branch
    %1327 = sbr.rel (0) target = $region17
  $region16: #{decoder_forward.1} parent=0 // pred_region
    _
  $region17: #{decoder_forward.1} parent=0 // pred_fallthru
    _
  // Predicated region
  $region18: #{decoder_forward.1} parent=0 // pred_check
    _
  $region19: #{decoder_forward.1} parent=0 // pred_check_branch
    %1329 = sbr.rel (0) target = $region21
  $region20: #{decoder_forward.1} parent=0 // pred_region
    _
  $region21: #{decoder_forward.1} parent=0 // pred_fallthru
    _

</llo_original>
